<compile_context>
chip_gen: v5e
topology: v5e:2x2
jax: 0.10.0
libtpu: 0.0.40
codegen_flags: <defaults>
</compile_context>

<pallas_src>
import functools

import jax
import jax.numpy as jnp
from jax import lax
from jax.experimental import pallas as pl
from jax.experimental.pallas import tpu as pltpu


def _round_up(x, m):
    return ((x + m - 1) // m) * m


def _lem_recurrence_kernel(time_block, hp,
                           dt_ref, proj_ref, wy_ref, wz_ref,
                           ally_ref, allz_ref,
                           y_sc, z_sc):
    """One grid step = `time_block` timesteps of the LEM recurrence for one batch block.

    proj_ref : (TT, BB, 4*hp)  precomputed [u@Wu1+b1 | u@Wu2+b2 | u@Wu3+b3 | u@Wzu+bz]
    wy_ref   : (hp, 3*hp)      fused [Wy1 | Wy2 | Wy3]   (whole-array VMEM resident)
    wz_ref   : (hp, hp)        Wzz                         (whole-array VMEM resident)
    """
    # Zero-init carried hidden states at the first time block of each batch block.
    @pl.when(pl.program_id(1) == 0)
    def _():
        y_sc[...] = jnp.zeros_like(y_sc)
        z_sc[...] = jnp.zeros_like(z_sc)

    dt = dt_ref[0]
    wy = wy_ref[...]          # hoisted: loaded once per grid step, reused by all timesteps
    wz = wz_ref[...]

    def step(tt, carry):
        y, z = carry
        p = proj_ref[tt]                                       # (BB, 4*hp), one dense load
        p_gates = p[:, :3 * hp]                                # lane-aligned slices (no copy)
        p_lin = p[:, 3 * hp:]
        # Fused gate pre-activations: one MXU matmul instead of three.
        g = jnp.dot(y.astype(wy.dtype), wy,
                    preferred_element_type=jnp.float32) + p_gates
        g1 = g[:, :hp]
        g2 = g[:, hp:2 * hp]
        g3 = g[:, 2 * hp:]
        ms_dt_bar = dt * jax.nn.sigmoid(g1)                    # EUP
        ms_dt = dt * jax.nn.sigmoid(g2)
        z_new = (1.0 - ms_dt) * z + ms_dt * jnp.tanh(g3)
        lin = jnp.dot(z_new.astype(wz.dtype), wz,
                      preferred_element_type=jnp.float32) + p_lin
        y_new = (1.0 - ms_dt_bar) * y + ms_dt_bar * jnp.tanh(lin)
        ally_ref[tt] = y_new
        allz_ref[tt] = z_new
        return (y_new, z_new)

    y_fin, z_fin = lax.fori_loop(0, time_block, step,
                                 (y_sc[...], z_sc[...]), unroll=True)
    y_sc[...] = y_fin
    z_sc[...] = z_fin


def lem_forward(inputs, weights, weights_lin_z, bias, bias_lin_z, wc, bc,
                dt=1.0, *, time_block=8, batch_block=None,
                param_dtype=jnp.float32):
    """Pallas LEM forward. Returns (out, all_y, all_z)."""
    T, B, ninp = inputs.shape
    nhid = weights_lin_z.shape[0]
    nout = wc.shape[0]
    f32 = jnp.float32

    # ---- lane/sublane-friendly padded sizes ----
    hp = _round_up(nhid, 128)                                     # hidden -> lane multiple
    bb = _round_up(B if batch_block is None else batch_block, 8)  # batch block (sublanes)
    bp = _round_up(B, bb)                                         # padded batch
    tt = max(1, int(time_block))
    tp = _round_up(T, tt)                                         # padded time

    def pad2(m, rows, cols):
        return jnp.pad(m.astype(f32),
                       ((0, rows - m.shape[0]), (0, cols - m.shape[1])))

    def pad1(v, n):
        return jnp.pad(v.astype(f32), (0, n - v.shape[0]))

    # Split the (3*nhid, ninp+nhid) RNN weight per gate; X concat order is [y, u].
    w1, w2, w3 = jnp.split(weights, 3, axis=0)
    wy = jnp.concatenate([pad2(w[:, :nhid].T, hp, hp) for w in (w1, w2, w3)],
                         axis=1)                                  # (hp, 3*hp)
    wz = pad2(weights_lin_z[:, :nhid].T, hp, hp)                  # (hp, hp)

    # Input-side weights for the hoisted projection GEMM.
    wu = jnp.concatenate(
        [pad2(w[:, nhid:].T, ninp, hp) for w in (w1, w2, w3)]
        + [pad2(weights_lin_z[:, nhid:].T, ninp, hp)], axis=1)    # (ninp, 4*hp)
    b1, b2, b3 = jnp.split(bias, 3)
    ball = jnp.concatenate([pad1(b1, hp), pad1(b2, hp), pad1(b3, hp),
                            pad1(bias_lin_z, hp)])                # (4*hp,)

    # ---- Hoisted GEMM #1: all input projections + biases for every timestep at once ----
    proj = (inputs.reshape(T * B, ninp).astype(f32) @ wu + ball).reshape(T, B, 4 * hp)
    proj = jnp.pad(proj, ((0, tp - T), (0, bp - B), (0, 0)))      # (tp, bp, 4*hp)

    wy = wy.astype(param_dtype)
    wz = wz.astype(param_dtype)
    dt_arr = jnp.asarray([dt], f32)

    nb, nt = bp // bb, tp // tt

    grid_spec = pltpu.PrefetchScalarGridSpec(
        num_scalar_prefetch=0,
        grid=(nb, nt),
        in_specs=[
            pl.BlockSpec(memory_space=pltpu.MemorySpace.SMEM),       # dt scalar
            pl.BlockSpec((tt, bb, 4 * hp), lambda b, t: (t, b, 0)),  # proj, one time block
            pl.BlockSpec(memory_space=pltpu.MemorySpace.VMEM),       # fused Wy (single copy)
            pl.BlockSpec(memory_space=pltpu.MemorySpace.VMEM),       # Wzz     (single copy)
        ],
        out_specs=[
            pl.BlockSpec((tt, bb, hp), lambda b, t: (t, b, 0)),      # all_y
            pl.BlockSpec((tt, bb, hp), lambda b, t: (t, b, 0)),      # all_z
        ],
        scratch_shapes=[
            pltpu.VMEM((bb, hp), f32),   # carried y state
            pltpu.VMEM((bb, hp), f32),   # carried z state
        ],
    )

    out_shapes = (
        jax.ShapeDtypeStruct((tp, bp, hp), f32),
        jax.ShapeDtypeStruct((tp, bp, hp), f32),
    )

    fn = pl.pallas_call(
        functools.partial(_lem_recurrence_kernel, tt, hp),
        grid_spec=grid_spec,
        out_shape=out_shapes,
        compiler_params=pltpu.CompilerParams(
            # batch blocks are independent (megacore-shardable on v7x); time is serial.
            dimension_semantics=("parallel", "arbitrary")),
    )
    all_y_p, all_z_p = fn(dt_arr, proj, wy, wz)

    all_y = all_y_p[:T, :B, :nhid]
    all_z = all_z_p[:T, :B, :nhid]

    # ---- Hoisted GEMM #2: classifier head over all timesteps at once ----
    out = (all_y.reshape(T * B, nhid) @ wc.T.astype(f32)
           + bc.astype(f32)).reshape(T, B, nout)
    return out, all_y, all_z


def lem_reference(inputs, weights, weights_lin_z, bias, bias_lin_z, wc, bc, dt=1.0):
    """Pure-JAX reference of the same forward pass (for validation)."""
    T, B, _ = inputs.shape
    nhid = weights_lin_z.shape[0]
    y = jnp.zeros((B, nhid), jnp.float32)
    z = jnp.zeros((B, nhid), jnp.float32)
    ys = []
    for t in range(T):
        u = inputs[t]
        X = jnp.concatenate([y, u], axis=1)
        G = X @ weights.T + bias
        g1, g2, g3 = jnp.split(G, 3, axis=1)
        ms_dt_bar = dt * jax.nn.sigmoid(g1)
        ms_dt = dt * jax.nn.sigmoid(g2)
        z = (1.0 - ms_dt) * z + ms_dt * jnp.tanh(g3)
        X2 = jnp.concatenate([z, u], axis=1)
        y = (1.0 - ms_dt_bar) * y + ms_dt_bar * jnp.tanh(X2 @ weights_lin_z.T + bias_lin_z)
        ys.append(y)
    all_y = jnp.stack(ys)
    return all_y @ wc.T + bc


if __name__ == "__main__":
    # Small shapes consistent with the module: seq=8, batch=2, ninp=16, nhid=32, nout=8
    T, B, NINP, NHID, NOUT = 8, 2, 16, 32, 8
    DT = 1.0

    key = jax.random.PRNGKey(0)
    ks = jax.random.split(key, 8)
    stdv = 1.0 / (NHID ** 0.5)

    inputs = jax.random.normal(ks[0], (T, B, NINP), jnp.float32)
    weights = jax.random.uniform(ks[1], (3 * NHID, NINP + NHID), jnp.float32, -stdv, stdv)
    weights_lin_z = jax.random.uniform(ks[2], (NHID, NINP + NHID), jnp.float32, -stdv, stdv)
    bias = jax.random.uniform(ks[3], (3 * NHID,), jnp.float32, -stdv, stdv)
    bias_lin_z = jax.random.uniform(ks[4], (NHID,), jnp.float32, -stdv, stdv)
    # classifier: kaiming-normal-ish weight, uniform bias (deterministic synthetic init)
    wc = jax.random.normal(ks[5], (NOUT, NHID), jnp.float32) * (2.0 / NHID) ** 0.5
    bc = jax.random.uniform(ks[6], (NOUT,), jnp.float32, -stdv, stdv)

    # fp32 path (default): must match the reference tightly.
    out, all_y, all_z = lem_forward(inputs, weights, weights_lin_z, bias, bias_lin_z,
                                    wc, bc, dt=DT, time_block=8)
    out = jax.block_until_ready(out)

    ref = lem_reference(inputs, weights, weights_lin_z, bias, bias_lin_z, wc, bc, dt=DT)
    assert out.shape == (T, B, NOUT)
    assert all_y.shape == (T, B, NHID) and all_z.shape == (T, B, NHID)
    assert jnp.allclose(out, ref, atol=1e-4, rtol=1e-4), "mismatch vs JAX reference"

    # Non-trivial time blocking path (grid with multiple serial time blocks).
    out_tb2, _, _ = lem_forward(inputs, weights, weights_lin_z, bias, bias_lin_z,
                                wc, bc, dt=DT, time_block=2)
    out_tb2 = jax.block_until_ready(out_tb2)
    assert jnp.allclose(out_tb2, ref, atol=1e-4, rtol=1e-4), "time-block mismatch"

    # bf16 weight-storage path (v6e/v7x MXU throughput / VMEM footprint): smoke test only.
    out_bf16, _, _ = lem_forward(inputs, weights, weights_lin_z, bias, bias_lin_z,
                                 wc, bc, dt=DT, time_block=4,
                                 param_dtype=jnp.bfloat16)
    out_bf16 = jax.block_until_ready(out_bf16)
    assert bool(jnp.isfinite(out_bf16).all())

    print("KERNEL_OK")
</pallas_src>

<mosaic_0001>
module attributes {stable_mosaic.version = 11 : i64} {
  func.func @_lem_recurrence_kernel(%arg0: i32, %arg1: i32, %arg2: memref<1xf32, #tpu.memory_space<smem>>, %arg3: memref<8x8x512xf32, #tpu.memory_space<vmem>>, %arg4: memref<128x384xf32, #tpu.memory_space<vmem>>, %arg5: memref<128x128xf32, #tpu.memory_space<vmem>>, %arg6: memref<8x8x128xf32, #tpu.memory_space<vmem>>, %arg7: memref<8x8x128xf32, #tpu.memory_space<vmem>>, %arg8: memref<8x128xf32, #tpu.memory_space<vmem>>, %arg9: memref<8x128xf32, #tpu.memory_space<vmem>>) attributes {dimension_semantics = [#tpu.dimension_semantics<parallel>, #tpu.dimension_semantics<arbitrary>], iteration_bounds = array<i64: 1, 1>, scalar_prefetch = 0 : i64, scratch_operands = 2 : i64, tpu.core_type = #tpu.core_type<tc>, window_params = [{transform_indices = @transform_0, window_bounds = array<i64: 1>}, {transform_indices = @transform_1, window_bounds = array<i64: 8, 8, 512>}, {pipeline_mode = #tpu.pipeline_mode<synchronous>, transform_indices = @transform_2, window_bounds = array<i64: 128, 384>}, {pipeline_mode = #tpu.pipeline_mode<synchronous>, transform_indices = @transform_3, window_bounds = array<i64: 128, 128>}, {transform_indices = @transform_4, window_bounds = array<i64: 8, 8, 128>}, {transform_indices = @transform_5, window_bounds = array<i64: 8, 8, 128>}]} {
    %c0_i32 = arith.constant 0 : i32
    %0 = arith.cmpi eq, %arg1, %c0_i32 : i32
    %1 = arith.extui %0 : i1 to i32
    %c0_i32_0 = arith.constant 0 : i32
    %2 = arith.cmpi ne, %1, %c0_i32_0 : i32
    scf.if %2 {
      %cst_109 = arith.constant 0.000000e+00 : f32
      %378 = vector.broadcast %cst_109 : f32 to vector<8x128xf32>
      %c0_110 = arith.constant 0 : index
      %c0_111 = arith.constant 0 : index
      %379 = vector.load %arg8[%c0_110, %c0_111] : memref<8x128xf32, #tpu.memory_space<vmem>>, vector<8x128xf32>
      tpu.vector_store %arg8[%c0_110, %c0_111], %378 {strides = array<i32>} : memref<8x128xf32, #tpu.memory_space<vmem>>, vector<8x128xf32>,
      %cst_112 = arith.constant 0.000000e+00 : f32
      %380 = vector.broadcast %cst_112 : f32 to vector<8x128xf32>
      %c0_113 = arith.constant 0 : index
      %c0_114 = arith.constant 0 : index
      %381 = vector.load %arg9[%c0_113, %c0_114] : memref<8x128xf32, #tpu.memory_space<vmem>>, vector<8x128xf32>
      tpu.vector_store %arg9[%c0_113, %c0_114], %380 {strides = array<i32>} : memref<8x128xf32, #tpu.memory_space<vmem>>, vector<8x128xf32>,
    } else {
    }
    %c0 = arith.constant 0 : index
    %3 = memref.load %arg2[%c0] : memref<1xf32, #tpu.memory_space<smem>>
    %c0_1 = arith.constant 0 : index
    %c0_2 = arith.constant 0 : index
    %4 = vector.load %arg4[%c0_1, %c0_2] : memref<128x384xf32, #tpu.memory_space<vmem>>, vector<128x384xf32>
    %c0_3 = arith.constant 0 : index
    %c0_4 = arith.constant 0 : index
    %5 = vector.load %arg5[%c0_3, %c0_4] : memref<128x128xf32, #tpu.memory_space<vmem>>, vector<128x128xf32>
    %c0_5 = arith.constant 0 : index
    %c0_6 = arith.constant 0 : index
    %6 = vector.load %arg8[%c0_5, %c0_6] : memref<8x128xf32, #tpu.memory_space<vmem>>, vector<8x128xf32>
    %c0_7 = arith.constant 0 : index
    %c0_8 = arith.constant 0 : index
    %7 = vector.load %arg9[%c0_7, %c0_8] : memref<8x128xf32, #tpu.memory_space<vmem>>, vector<8x128xf32>
    %c0_i32_9 = arith.constant 0 : i32
    %8 = arith.index_cast %c0_i32_9 : i32 to index
    %c0_10 = arith.constant 0 : index
    %c0_11 = arith.constant 0 : index
    %9 = vector.load %arg3[%8, %c0_10, %c0_11] : memref<8x8x512xf32, #tpu.memory_space<vmem>>, vector<1x8x512xf32>
    %10 = vector.shape_cast %9 : vector<1x8x512xf32> to vector<8x512xf32>
    %11 = vector.extract_strided_slice %10 {offsets = [0, 0], sizes = [8, 384], strides = [1, 1]} : vector<8x512xf32> to vector<8x384xf32>
    %12 = vector.extract_strided_slice %10 {offsets = [0, 384], sizes = [8, 128], strides = [1, 1]} : vector<8x512xf32> to vector<8x128xf32>
    %cst = arith.constant dense<0.000000e+00> : vector<8x384xf32>
    %13 = tpu.matmul %6, %4, %cst {dimension_numbers = #tpu.dot_dimension_numbers<[1], [0], [0], [1], [0, 0, 1, 1], [], []>} : vector<8x128xf32>, vector<128x384xf32>, vector<8x384xf32> -> vector<8x384xf32>
    %14 = arith.addf %13, %11 : vector<8x384xf32>
    %15 = vector.extract_strided_slice %14 {offsets = [0, 0], sizes = [8, 128], strides = [1, 1]} : vector<8x384xf32> to vector<8x128xf32>
    %16 = vector.extract_strided_slice %14 {offsets = [0, 128], sizes = [8, 128], strides = [1, 1]} : vector<8x384xf32> to vector<8x128xf32>
    %17 = vector.extract_strided_slice %14 {offsets = [0, 256], sizes = [8, 128], strides = [1, 1]} : vector<8x384xf32> to vector<8x128xf32>
    %18 = arith.negf %15 : vector<8x128xf32>
    %19 = math.exp %18 : vector<8x128xf32>
    %cst_12 = arith.constant 1.000000e+00 : f32
    %20 = vector.broadcast %cst_12 : f32 to vector<8x128xf32>
    %21 = arith.addf %20, %19 : vector<8x128xf32>
    %22 = arith.divf %20, %21 : vector<8x128xf32>
    %23 = vector.broadcast %3 : f32 to vector<8x128xf32>
    %24 = arith.mulf %23, %22 : vector<8x128xf32>
    %25 = arith.negf %16 : vector<8x128xf32>
    %26 = math.exp %25 : vector<8x128xf32>
    %cst_13 = arith.constant 1.000000e+00 : f32
    %27 = vector.broadcast %cst_13 : f32 to vector<8x128xf32>
    %28 = arith.addf %27, %26 : vector<8x128xf32>
    %29 = arith.divf %27, %28 : vector<8x128xf32>
    %30 = vector.broadcast %3 : f32 to vector<8x128xf32>
    %31 = arith.mulf %30, %29 : vector<8x128xf32>
    %cst_14 = arith.constant 1.000000e+00 : f32
    %32 = vector.broadcast %cst_14 : f32 to vector<8x128xf32>
    %33 = arith.subf %32, %31 : vector<8x128xf32>
    %34 = arith.mulf %33, %7 : vector<8x128xf32>
    %35 = math.tanh %17 : vector<8x128xf32>
    %36 = arith.mulf %31, %35 : vector<8x128xf32>
    %37 = arith.addf %34, %36 : vector<8x128xf32>
    %cst_15 = arith.constant dense<0.000000e+00> : vector<8x128xf32>
    %38 = tpu.matmul %37, %5, %cst_15 {dimension_numbers = #tpu.dot_dimension_numbers<[1], [0], [0], [1], [0, 0, 1, 1], [], []>} : vector<8x128xf32>, vector<128x128xf32>, vector<8x128xf32> -> vector<8x128xf32>
    %39 = arith.addf %38, %12 : vector<8x128xf32>
    %cst_16 = arith.constant 1.000000e+00 : f32
    %40 = vector.broadcast %cst_16 : f32 to vector<8x128xf32>
    %41 = arith.subf %40, %24 : vector<8x128xf32>
    %42 = arith.mulf %41, %6 : vector<8x128xf32>
    %43 = math.tanh %39 : vector<8x128xf32>
    %44 = arith.mulf %24, %43 : vector<8x128xf32>
    %45 = arith.addf %42, %44 : vector<8x128xf32>
    %46 = arith.index_cast %c0_i32_9 : i32 to index
    %c0_17 = arith.constant 0 : index
    %c0_18 = arith.constant 0 : index
    %47 = vector.load %arg6[%46, %c0_17, %c0_18] : memref<8x8x128xf32, #tpu.memory_space<vmem>>, vector<1x8x128xf32>
    %48 = vector.shape_cast %47 : vector<1x8x128xf32> to vector<8x128xf32>
    %49 = vector.shape_cast %45 : vector<8x128xf32> to vector<1x8x128xf32>
    tpu.vector_store %arg6[%46, %c0_17, %c0_18], %49 {strides = array<i32>} : memref<8x8x128xf32, #tpu.memory_space<vmem>>, vector<1x8x128xf32>,
    %50 = arith.index_cast %c0_i32_9 : i32 to index
    %c0_19 = arith.constant 0 : index
    %c0_20 = arith.constant 0 : index
    %51 = vector.load %arg7[%50, %c0_19, %c0_20] : memref<8x8x128xf32, #tpu.memory_space<vmem>>, vector<1x8x128xf32>
    %52 = vector.shape_cast %51 : vector<1x8x128xf32> to vector<8x128xf32>
    %53 = vector.shape_cast %37 : vector<8x128xf32> to vector<1x8x128xf32>
    tpu.vector_store %arg7[%50, %c0_19, %c0_20], %53 {strides = array<i32>} : memref<8x8x128xf32, #tpu.memory_space<vmem>>, vector<1x8x128xf32>,
    %c1_i32 = arith.constant 1 : i32
    %54 = arith.index_cast %c1_i32 : i32 to index
    %c0_21 = arith.constant 0 : index
    %c0_22 = arith.constant 0 : index
    %55 = vector.load %arg3[%54, %c0_21, %c0_22] : memref<8x8x512xf32, #tpu.memory_space<vmem>>, vector<1x8x512xf32>
    %56 = vector.shape_cast %55 : vector<1x8x512xf32> to vector<8x512xf32>
    %57 = vector.extract_strided_slice %56 {offsets = [0, 0], sizes = [8, 384], strides = [1, 1]} : vector<8x512xf32> to vector<8x384xf32>
    %58 = vector.extract_strided_slice %56 {offsets = [0, 384], sizes = [8, 128], strides = [1, 1]} : vector<8x512xf32> to vector<8x128xf32>
    %cst_23 = arith.constant dense<0.000000e+00> : vector<8x384xf32>
    %59 = tpu.matmul %45, %4, %cst_23 {dimension_numbers = #tpu.dot_dimension_numbers<[1], [0], [0], [1], [0, 0, 1, 1], [], []>} : vector<8x128xf32>, vector<128x384xf32>, vector<8x384xf32> -> vector<8x384xf32>
    %60 = arith.addf %59, %57 : vector<8x384xf32>
    %61 = vector.extract_strided_slice %60 {offsets = [0, 0], sizes = [8, 128], strides = [1, 1]} : vector<8x384xf32> to vector<8x128xf32>
    %62 = vector.extract_strided_slice %60 {offsets = [0, 128], sizes = [8, 128], strides = [1, 1]} : vector<8x384xf32> to vector<8x128xf32>
    %63 = vector.extract_strided_slice %60 {offsets = [0, 256], sizes = [8, 128], strides = [1, 1]} : vector<8x384xf32> to vector<8x128xf32>
    %64 = arith.negf %61 : vector<8x128xf32>
    %65 = math.exp %64 : vector<8x128xf32>
    %cst_24 = arith.constant 1.000000e+00 : f32
    %66 = vector.broadcast %cst_24 : f32 to vector<8x128xf32>
    %67 = arith.addf %66, %65 : vector<8x128xf32>
    %68 = arith.divf %66, %67 : vector<8x128xf32>
    %69 = vector.broadcast %3 : f32 to vector<8x128xf32>
    %70 = arith.mulf %69, %68 : vector<8x128xf32>
    %71 = arith.negf %62 : vector<8x128xf32>
    %72 = math.exp %71 : vector<8x128xf32>
    %cst_25 = arith.constant 1.000000e+00 : f32
    %73 = vector.broadcast %cst_25 : f32 to vector<8x128xf32>
    %74 = arith.addf %73, %72 : vector<8x128xf32>
    %75 = arith.divf %73, %74 : vector<8x128xf32>
    %76 = vector.broadcast %3 : f32 to vector<8x128xf32>
    %77 = arith.mulf %76, %75 : vector<8x128xf32>
    %cst_26 = arith.constant 1.000000e+00 : f32
    %78 = vector.broadcast %cst_26 : f32 to vector<8x128xf32>
    %79 = arith.subf %78, %77 : vector<8x128xf32>
    %80 = arith.mulf %79, %37 : vector<8x128xf32>
    %81 = math.tanh %63 : vector<8x128xf32>
    %82 = arith.mulf %77, %81 : vector<8x128xf32>
    %83 = arith.addf %80, %82 : vector<8x128xf32>
    %cst_27 = arith.constant dense<0.000000e+00> : vector<8x128xf32>
    %84 = tpu.matmul %83, %5, %cst_27 {dimension_numbers = #tpu.dot_dimension_numbers<[1], [0], [0], [1], [0, 0, 1, 1], [], []>} : vector<8x128xf32>, vector<128x128xf32>, vector<8x128xf32> -> vector<8x128xf32>
    %85 = arith.addf %84, %58 : vector<8x128xf32>
    %cst_28 = arith.constant 1.000000e+00 : f32
    %86 = vector.broadcast %cst_28 : f32 to vector<8x128xf32>
    %87 = arith.subf %86, %70 : vector<8x128xf32>
    %88 = arith.mulf %87, %45 : vector<8x128xf32>
    %89 = math.tanh %85 : vector<8x128xf32>
    %90 = arith.mulf %70, %89 : vector<8x128xf32>
    %91 = arith.addf %88, %90 : vector<8x128xf32>
    %92 = arith.index_cast %c1_i32 : i32 to index
    %c0_29 = arith.constant 0 : index
    %c0_30 = arith.constant 0 : index
    %93 = vector.load %arg6[%92, %c0_29, %c0_30] : memref<8x8x128xf32, #tpu.memory_space<vmem>>, vector<1x8x128xf32>
    %94 = vector.shape_cast %93 : vector<1x8x128xf32> to vector<8x128xf32>
    %95 = vector.shape_cast %91 : vector<8x128xf32> to vector<1x8x128xf32>
    tpu.vector_store %arg6[%92, %c0_29, %c0_30], %95 {strides = array<i32>} : memref<8x8x128xf32, #tpu.memory_space<vmem>>, vector<1x8x128xf32>,
    %96 = arith.index_cast %c1_i32 : i32 to index
    %c0_31 = arith.constant 0 : index
    %c0_32 = arith.constant 0 : index
    %97 = vector.load %arg7[%96, %c0_31, %c0_32] : memref<8x8x128xf32, #tpu.memory_space<vmem>>, vector<1x8x128xf32>
    %98 = vector.shape_cast %97 : vector<1x8x128xf32> to vector<8x128xf32>
    %99 = vector.shape_cast %83 : vector<8x128xf32> to vector<1x8x128xf32>
    tpu.vector_store %arg7[%96, %c0_31, %c0_32], %99 {strides = array<i32>} : memref<8x8x128xf32, #tpu.memory_space<vmem>>, vector<1x8x128xf32>,
    %c2_i32 = arith.constant 2 : i32
    %100 = arith.index_cast %c2_i32 : i32 to index
    %c0_33 = arith.constant 0 : index
    %c0_34 = arith.constant 0 : index
    %101 = vector.load %arg3[%100, %c0_33, %c0_34] : memref<8x8x512xf32, #tpu.memory_space<vmem>>, vector<1x8x512xf32>
    %102 = vector.shape_cast %101 : vector<1x8x512xf32> to vector<8x512xf32>
    %103 = vector.extract_strided_slice %102 {offsets = [0, 0], sizes = [8, 384], strides = [1, 1]} : vector<8x512xf32> to vector<8x384xf32>
    %104 = vector.extract_strided_slice %102 {offsets = [0, 384], sizes = [8, 128], strides = [1, 1]} : vector<8x512xf32> to vector<8x128xf32>
    %cst_35 = arith.constant dense<0.000000e+00> : vector<8x384xf32>
    %105 = tpu.matmul %91, %4, %cst_35 {dimension_numbers = #tpu.dot_dimension_numbers<[1], [0], [0], [1], [0, 0, 1, 1], [], []>} : vector<8x128xf32>, vector<128x384xf32>, vector<8x384xf32> -> vector<8x384xf32>
    %106 = arith.addf %105, %103 : vector<8x384xf32>
    %107 = vector.extract_strided_slice %106 {offsets = [0, 0], sizes = [8, 128], strides = [1, 1]} : vector<8x384xf32> to vector<8x128xf32>
    %108 = vector.extract_strided_slice %106 {offsets = [0, 128], sizes = [8, 128], strides = [1, 1]} : vector<8x384xf32> to vector<8x128xf32>
    %109 = vector.extract_strided_slice %106 {offsets = [0, 256], sizes = [8, 128], strides = [1, 1]} : vector<8x384xf32> to vector<8x128xf32>
    %110 = arith.negf %107 : vector<8x128xf32>
    %111 = math.exp %110 : vector<8x128xf32>
    %cst_36 = arith.constant 1.000000e+00 : f32
    %112 = vector.broadcast %cst_36 : f32 to vector<8x128xf32>
    %113 = arith.addf %112, %111 : vector<8x128xf32>
    %114 = arith.divf %112, %113 : vector<8x128xf32>
    %115 = vector.broadcast %3 : f32 to vector<8x128xf32>
    %116 = arith.mulf %115, %114 : vector<8x128xf32>
    %117 = arith.negf %108 : vector<8x128xf32>
    %118 = math.exp %117 : vector<8x128xf32>
    %cst_37 = arith.constant 1.000000e+00 : f32
    %119 = vector.broadcast %cst_37 : f32 to vector<8x128xf32>
    %120 = arith.addf %119, %118 : vector<8x128xf32>
    %121 = arith.divf %119, %120 : vector<8x128xf32>
    %122 = vector.broadcast %3 : f32 to vector<8x128xf32>
    %123 = arith.mulf %122, %121 : vector<8x128xf32>
    %cst_38 = arith.constant 1.000000e+00 : f32
    %124 = vector.broadcast %cst_38 : f32 to vector<8x128xf32>
    %125 = arith.subf %124, %123 : vector<8x128xf32>
    %126 = arith.mulf %125, %83 : vector<8x128xf32>
    %127 = math.tanh %109 : vector<8x128xf32>
    %128 = arith.mulf %123, %127 : vector<8x128xf32>
    %129 = arith.addf %126, %128 : vector<8x128xf32>
    %cst_39 = arith.constant dense<0.000000e+00> : vector<8x128xf32>
    %130 = tpu.matmul %129, %5, %cst_39 {dimension_numbers = #tpu.dot_dimension_numbers<[1], [0], [0], [1], [0, 0, 1, 1], [], []>} : vector<8x128xf32>, vector<128x128xf32>, vector<8x128xf32> -> vector<8x128xf32>
    %131 = arith.addf %130, %104 : vector<8x128xf32>
    %cst_40 = arith.constant 1.000000e+00 : f32
    %132 = vector.broadcast %cst_40 : f32 to vector<8x128xf32>
    %133 = arith.subf %132, %116 : vector<8x128xf32>
    %134 = arith.mulf %133, %91 : vector<8x128xf32>
    %135 = math.tanh %131 : vector<8x128xf32>
    %136 = arith.mulf %116, %135 : vector<8x128xf32>
    %137 = arith.addf %134, %136 : vector<8x128xf32>
    %138 = arith.index_cast %c2_i32 : i32 to index
    %c0_41 = arith.constant 0 : index
    %c0_42 = arith.constant 0 : index
    %139 = vector.load %arg6[%138, %c0_41, %c0_42] : memref<8x8x128xf32, #tpu.memory_space<vmem>>, vector<1x8x128xf32>
    %140 = vector.shape_cast %139 : vector<1x8x128xf32> to vector<8x128xf32>
    %141 = vector.shape_cast %137 : vector<8x128xf32> to vector<1x8x128xf32>
    tpu.vector_store %arg6[%138, %c0_41, %c0_42], %141 {strides = array<i32>} : memref<8x8x128xf32, #tpu.memory_space<vmem>>, vector<1x8x128xf32>,
    %142 = arith.index_cast %c2_i32 : i32 to index
    %c0_43 = arith.constant 0 : index
    %c0_44 = arith.constant 0 : index
    %143 = vector.load %arg7[%142, %c0_43, %c0_44] : memref<8x8x128xf32, #tpu.memory_space<vmem>>, vector<1x8x128xf32>
    %144 = vector.shape_cast %143 : vector<1x8x128xf32> to vector<8x128xf32>
    %145 = vector.shape_cast %129 : vector<8x128xf32> to vector<1x8x128xf32>
    tpu.vector_store %arg7[%142, %c0_43, %c0_44], %145 {strides = array<i32>} : memref<8x8x128xf32, #tpu.memory_space<vmem>>, vector<1x8x128xf32>,
    %c3_i32 = arith.constant 3 : i32
    %146 = arith.index_cast %c3_i32 : i32 to index
    %c0_45 = arith.constant 0 : index
    %c0_46 = arith.constant 0 : index
    %147 = vector.load %arg3[%146, %c0_45, %c0_46] : memref<8x8x512xf32, #tpu.memory_space<vmem>>, vector<1x8x512xf32>
    %148 = vector.shape_cast %147 : vector<1x8x512xf32> to vector<8x512xf32>
    %149 = vector.extract_strided_slice %148 {offsets = [0, 0], sizes = [8, 384], strides = [1, 1]} : vector<8x512xf32> to vector<8x384xf32>
    %150 = vector.extract_strided_slice %148 {offsets = [0, 384], sizes = [8, 128], strides = [1, 1]} : vector<8x512xf32> to vector<8x128xf32>
    %cst_47 = arith.constant dense<0.000000e+00> : vector<8x384xf32>
    %151 = tpu.matmul %137, %4, %cst_47 {dimension_numbers = #tpu.dot_dimension_numbers<[1], [0], [0], [1], [0, 0, 1, 1], [], []>} : vector<8x128xf32>, vector<128x384xf32>, vector<8x384xf32> -> vector<8x384xf32>
    %152 = arith.addf %151, %149 : vector<8x384xf32>
    %153 = vector.extract_strided_slice %152 {offsets = [0, 0], sizes = [8, 128], strides = [1, 1]} : vector<8x384xf32> to vector<8x128xf32>
    %154 = vector.extract_strided_slice %152 {offsets = [0, 128], sizes = [8, 128], strides = [1, 1]} : vector<8x384xf32> to vector<8x128xf32>
    %155 = vector.extract_strided_slice %152 {offsets = [0, 256], sizes = [8, 128], strides = [1, 1]} : vector<8x384xf32> to vector<8x128xf32>
    %156 = arith.negf %153 : vector<8x128xf32>
    %157 = math.exp %156 : vector<8x128xf32>
    %cst_48 = arith.constant 1.000000e+00 : f32
    %158 = vector.broadcast %cst_48 : f32 to vector<8x128xf32>
    %159 = arith.addf %158, %157 : vector<8x128xf32>
    %160 = arith.divf %158, %159 : vector<8x128xf32>
    %161 = vector.broadcast %3 : f32 to vector<8x128xf32>
    %162 = arith.mulf %161, %160 : vector<8x128xf32>
    %163 = arith.negf %154 : vector<8x128xf32>
    %164 = math.exp %163 : vector<8x128xf32>
    %cst_49 = arith.constant 1.000000e+00 : f32
    %165 = vector.broadcast %cst_49 : f32 to vector<8x128xf32>
    %166 = arith.addf %165, %164 : vector<8x128xf32>
    %167 = arith.divf %165, %166 : vector<8x128xf32>
    %168 = vector.broadcast %3 : f32 to vector<8x128xf32>
    %169 = arith.mulf %168, %167 : vector<8x128xf32>
    %cst_50 = arith.constant 1.000000e+00 : f32
    %170 = vector.broadcast %cst_50 : f32 to vector<8x128xf32>
    %171 = arith.subf %170, %169 : vector<8x128xf32>
    %172 = arith.mulf %171, %129 : vector<8x128xf32>
    %173 = math.tanh %155 : vector<8x128xf32>
    %174 = arith.mulf %169, %173 : vector<8x128xf32>
    %175 = arith.addf %172, %174 : vector<8x128xf32>
    %cst_51 = arith.constant dense<0.000000e+00> : vector<8x128xf32>
    %176 = tpu.matmul %175, %5, %cst_51 {dimension_numbers = #tpu.dot_dimension_numbers<[1], [0], [0], [1], [0, 0, 1, 1], [], []>} : vector<8x128xf32>, vector<128x128xf32>, vector<8x128xf32> -> vector<8x128xf32>
    %177 = arith.addf %176, %150 : vector<8x128xf32>
    %cst_52 = arith.constant 1.000000e+00 : f32
    %178 = vector.broadcast %cst_52 : f32 to vector<8x128xf32>
    %179 = arith.subf %178, %162 : vector<8x128xf32>
    %180 = arith.mulf %179, %137 : vector<8x128xf32>
    %181 = math.tanh %177 : vector<8x128xf32>
    %182 = arith.mulf %162, %181 : vector<8x128xf32>
    %183 = arith.addf %180, %182 : vector<8x128xf32>
    %184 = arith.index_cast %c3_i32 : i32 to index
    %c0_53 = arith.constant 0 : index
    %c0_54 = arith.constant 0 : index
    %185 = vector.load %arg6[%184, %c0_53, %c0_54] : memref<8x8x128xf32, #tpu.memory_space<vmem>>, vector<1x8x128xf32>
    %186 = vector.shape_cast %185 : vector<1x8x128xf32> to vector<8x128xf32>
    %187 = vector.shape_cast %183 : vector<8x128xf32> to vector<1x8x128xf32>
    tpu.vector_store %arg6[%184, %c0_53, %c0_54], %187 {strides = array<i32>} : memref<8x8x128xf32, #tpu.memory_space<vmem>>, vector<1x8x128xf32>,
    %188 = arith.index_cast %c3_i32 : i32 to index
    %c0_55 = arith.constant 0 : index
    %c0_56 = arith.constant 0 : index
    %189 = vector.load %arg7[%188, %c0_55, %c0_56] : memref<8x8x128xf32, #tpu.memory_space<vmem>>, vector<1x8x128xf32>
    %190 = vector.shape_cast %189 : vector<1x8x128xf32> to vector<8x128xf32>
    %191 = vector.shape_cast %175 : vector<8x128xf32> to vector<1x8x128xf32>
    tpu.vector_store %arg7[%188, %c0_55, %c0_56], %191 {strides = array<i32>} : memref<8x8x128xf32, #tpu.memory_space<vmem>>, vector<1x8x128xf32>,
    %c4_i32 = arith.constant 4 : i32
    %192 = arith.index_cast %c4_i32 : i32 to index
    %c0_57 = arith.constant 0 : index
    %c0_58 = arith.constant 0 : index
    %193 = vector.load %arg3[%192, %c0_57, %c0_58] : memref<8x8x512xf32, #tpu.memory_space<vmem>>, vector<1x8x512xf32>
    %194 = vector.shape_cast %193 : vector<1x8x512xf32> to vector<8x512xf32>
    %195 = vector.extract_strided_slice %194 {offsets = [0, 0], sizes = [8, 384], strides = [1, 1]} : vector<8x512xf32> to vector<8x384xf32>
    %196 = vector.extract_strided_slice %194 {offsets = [0, 384], sizes = [8, 128], strides = [1, 1]} : vector<8x512xf32> to vector<8x128xf32>
    %cst_59 = arith.constant dense<0.000000e+00> : vector<8x384xf32>
    %197 = tpu.matmul %183, %4, %cst_59 {dimension_numbers = #tpu.dot_dimension_numbers<[1], [0], [0], [1], [0, 0, 1, 1], [], []>} : vector<8x128xf32>, vector<128x384xf32>, vector<8x384xf32> -> vector<8x384xf32>
    %198 = arith.addf %197, %195 : vector<8x384xf32>
    %199 = vector.extract_strided_slice %198 {offsets = [0, 0], sizes = [8, 128], strides = [1, 1]} : vector<8x384xf32> to vector<8x128xf32>
    %200 = vector.extract_strided_slice %198 {offsets = [0, 128], sizes = [8, 128], strides = [1, 1]} : vector<8x384xf32> to vector<8x128xf32>
    %201 = vector.extract_strided_slice %198 {offsets = [0, 256], sizes = [8, 128], strides = [1, 1]} : vector<8x384xf32> to vector<8x128xf32>
    %202 = arith.negf %199 : vector<8x128xf32>
    %203 = math.exp %202 : vector<8x128xf32>
    %cst_60 = arith.constant 1.000000e+00 : f32
    %204 = vector.broadcast %cst_60 : f32 to vector<8x128xf32>
    %205 = arith.addf %204, %203 : vector<8x128xf32>
    %206 = arith.divf %204, %205 : vector<8x128xf32>
    %207 = vector.broadcast %3 : f32 to vector<8x128xf32>
    %208 = arith.mulf %207, %206 : vector<8x128xf32>
    %209 = arith.negf %200 : vector<8x128xf32>
    %210 = math.exp %209 : vector<8x128xf32>
    %cst_61 = arith.constant 1.000000e+00 : f32
    %211 = vector.broadcast %cst_61 : f32 to vector<8x128xf32>
    %212 = arith.addf %211, %210 : vector<8x128xf32>
    %213 = arith.divf %211, %212 : vector<8x128xf32>
    %214 = vector.broadcast %3 : f32 to vector<8x128xf32>
    %215 = arith.mulf %214, %213 : vector<8x128xf32>
    %cst_62 = arith.constant 1.000000e+00 : f32
    %216 = vector.broadcast %cst_62 : f32 to vector<8x128xf32>
    %217 = arith.subf %216, %215 : vector<8x128xf32>
    %218 = arith.mulf %217, %175 : vector<8x128xf32>
    %219 = math.tanh %201 : vector<8x128xf32>
    %220 = arith.mulf %215, %219 : vector<8x128xf32>
    %221 = arith.addf %218, %220 : vector<8x128xf32>
    %cst_63 = arith.constant dense<0.000000e+00> : vector<8x128xf32>
    %222 = tpu.matmul %221, %5, %cst_63 {dimension_numbers = #tpu.dot_dimension_numbers<[1], [0], [0], [1], [0, 0, 1, 1], [], []>} : vector<8x128xf32>, vector<128x128xf32>, vector<8x128xf32> -> vector<8x128xf32>
    %223 = arith.addf %222, %196 : vector<8x128xf32>
    %cst_64 = arith.constant 1.000000e+00 : f32
    %224 = vector.broadcast %cst_64 : f32 to vector<8x128xf32>
    %225 = arith.subf %224, %208 : vector<8x128xf32>
    %226 = arith.mulf %225, %183 : vector<8x128xf32>
    %227 = math.tanh %223 : vector<8x128xf32>
    %228 = arith.mulf %208, %227 : vector<8x128xf32>
    %229 = arith.addf %226, %228 : vector<8x128xf32>
    %230 = arith.index_cast %c4_i32 : i32 to index
    %c0_65 = arith.constant 0 : index
    %c0_66 = arith.constant 0 : index
    %231 = vector.load %arg6[%230, %c0_65, %c0_66] : memref<8x8x128xf32, #tpu.memory_space<vmem>>, vector<1x8x128xf32>
    %232 = vector.shape_cast %231 : vector<1x8x128xf32> to vector<8x128xf32>
    %233 = vector.shape_cast %229 : vector<8x128xf32> to vector<1x8x128xf32>
    tpu.vector_store %arg6[%230, %c0_65, %c0_66], %233 {strides = array<i32>} : memref<8x8x128xf32, #tpu.memory_space<vmem>>, vector<1x8x128xf32>,
    %234 = arith.index_cast %c4_i32 : i32 to index
    %c0_67 = arith.constant 0 : index
    %c0_68 = arith.constant 0 : index
    %235 = vector.load %arg7[%234, %c0_67, %c0_68] : memref<8x8x128xf32, #tpu.memory_space<vmem>>, vector<1x8x128xf32>
    %236 = vector.shape_cast %235 : vector<1x8x128xf32> to vector<8x128xf32>
    %237 = vector.shape_cast %221 : vector<8x128xf32> to vector<1x8x128xf32>
    tpu.vector_store %arg7[%234, %c0_67, %c0_68], %237 {strides = array<i32>} : memref<8x8x128xf32, #tpu.memory_space<vmem>>, vector<1x8x128xf32>,
    %c5_i32 = arith.constant 5 : i32
    %238 = arith.index_cast %c5_i32 : i32 to index
    %c0_69 = arith.constant 0 : index
    %c0_70 = arith.constant 0 : index
    %239 = vector.load %arg3[%238, %c0_69, %c0_70] : memref<8x8x512xf32, #tpu.memory_space<vmem>>, vector<1x8x512xf32>
    %240 = vector.shape_cast %239 : vector<1x8x512xf32> to vector<8x512xf32>
    %241 = vector.extract_strided_slice %240 {offsets = [0, 0], sizes = [8, 384], strides = [1, 1]} : vector<8x512xf32> to vector<8x384xf32>
    %242 = vector.extract_strided_slice %240 {offsets = [0, 384], sizes = [8, 128], strides = [1, 1]} : vector<8x512xf32> to vector<8x128xf32>
    %cst_71 = arith.constant dense<0.000000e+00> : vector<8x384xf32>
    %243 = tpu.matmul %229, %4, %cst_71 {dimension_numbers = #tpu.dot_dimension_numbers<[1], [0], [0], [1], [0, 0, 1, 1], [], []>} : vector<8x128xf32>, vector<128x384xf32>, vector<8x384xf32> -> vector<8x384xf32>
    %244 = arith.addf %243, %241 : vector<8x384xf32>
    %245 = vector.extract_strided_slice %244 {offsets = [0, 0], sizes = [8, 128], strides = [1, 1]} : vector<8x384xf32> to vector<8x128xf32>
    %246 = vector.extract_strided_slice %244 {offsets = [0, 128], sizes = [8, 128], strides = [1, 1]} : vector<8x384xf32> to vector<8x128xf32>
    %247 = vector.extract_strided_slice %244 {offsets = [0, 256], sizes = [8, 128], strides = [1, 1]} : vector<8x384xf32> to vector<8x128xf32>
    %248 = arith.negf %245 : vector<8x128xf32>
    %249 = math.exp %248 : vector<8x128xf32>
    %cst_72 = arith.constant 1.000000e+00 : f32
    %250 = vector.broadcast %cst_72 : f32 to vector<8x128xf32>
    %251 = arith.addf %250, %249 : vector<8x128xf32>
    %252 = arith.divf %250, %251 : vector<8x128xf32>
    %253 = vector.broadcast %3 : f32 to vector<8x128xf32>
    %254 = arith.mulf %253, %252 : vector<8x128xf32>
    %255 = arith.negf %246 : vector<8x128xf32>
    %256 = math.exp %255 : vector<8x128xf32>
    %cst_73 = arith.constant 1.000000e+00 : f32
    %257 = vector.broadcast %cst_73 : f32 to vector<8x128xf32>
    %258 = arith.addf %257, %256 : vector<8x128xf32>
    %259 = arith.divf %257, %258 : vector<8x128xf32>
    %260 = vector.broadcast %3 : f32 to vector<8x128xf32>
    %261 = arith.mulf %260, %259 : vector<8x128xf32>
    %cst_74 = arith.constant 1.000000e+00 : f32
    %262 = vector.broadcast %cst_74 : f32 to vector<8x128xf32>
    %263 = arith.subf %262, %261 : vector<8x128xf32>
    %264 = arith.mulf %263, %221 : vector<8x128xf32>
    %265 = math.tanh %247 : vector<8x128xf32>
    %266 = arith.mulf %261, %265 : vector<8x128xf32>
    %267 = arith.addf %264, %266 : vector<8x128xf32>
    %cst_75 = arith.constant dense<0.000000e+00> : vector<8x128xf32>
    %268 = tpu.matmul %267, %5, %cst_75 {dimension_numbers = #tpu.dot_dimension_numbers<[1], [0], [0], [1], [0, 0, 1, 1], [], []>} : vector<8x128xf32>, vector<128x128xf32>, vector<8x128xf32> -> vector<8x128xf32>
    %269 = arith.addf %268, %242 : vector<8x128xf32>
    %cst_76 = arith.constant 1.000000e+00 : f32
    %270 = vector.broadcast %cst_76 : f32 to vector<8x128xf32>
    %271 = arith.subf %270, %254 : vector<8x128xf32>
    %272 = arith.mulf %271, %229 : vector<8x128xf32>
    %273 = math.tanh %269 : vector<8x128xf32>
    %274 = arith.mulf %254, %273 : vector<8x128xf32>
    %275 = arith.addf %272, %274 : vector<8x128xf32>
    %276 = arith.index_cast %c5_i32 : i32 to index
    %c0_77 = arith.constant 0 : index
    %c0_78 = arith.constant 0 : index
    %277 = vector.load %arg6[%276, %c0_77, %c0_78] : memref<8x8x128xf32, #tpu.memory_space<vmem>>, vector<1x8x128xf32>
    %278 = vector.shape_cast %277 : vector<1x8x128xf32> to vector<8x128xf32>
    %279 = vector.shape_cast %275 : vector<8x128xf32> to vector<1x8x128xf32>
    tpu.vector_store %arg6[%276, %c0_77, %c0_78], %279 {strides = array<i32>} : memref<8x8x128xf32, #tpu.memory_space<vmem>>, vector<1x8x128xf32>,
    %280 = arith.index_cast %c5_i32 : i32 to index
    %c0_79 = arith.constant 0 : index
    %c0_80 = arith.constant 0 : index
    %281 = vector.load %arg7[%280, %c0_79, %c0_80] : memref<8x8x128xf32, #tpu.memory_space<vmem>>, vector<1x8x128xf32>
    %282 = vector.shape_cast %281 : vector<1x8x128xf32> to vector<8x128xf32>
    %283 = vector.shape_cast %267 : vector<8x128xf32> to vector<1x8x128xf32>
    tpu.vector_store %arg7[%280, %c0_79, %c0_80], %283 {strides = array<i32>} : memref<8x8x128xf32, #tpu.memory_space<vmem>>, vector<1x8x128xf32>,
    %c6_i32 = arith.constant 6 : i32
    %284 = arith.index_cast %c6_i32 : i32 to index
    %c0_81 = arith.constant 0 : index
    %c0_82 = arith.constant 0 : index
    %285 = vector.load %arg3[%284, %c0_81, %c0_82] : memref<8x8x512xf32, #tpu.memory_space<vmem>>, vector<1x8x512xf32>
    %286 = vector.shape_cast %285 : vector<1x8x512xf32> to vector<8x512xf32>
    %287 = vector.extract_strided_slice %286 {offsets = [0, 0], sizes = [8, 384], strides = [1, 1]} : vector<8x512xf32> to vector<8x384xf32>
    %288 = vector.extract_strided_slice %286 {offsets = [0, 384], sizes = [8, 128], strides = [1, 1]} : vector<8x512xf32> to vector<8x128xf32>
    %cst_83 = arith.constant dense<0.000000e+00> : vector<8x384xf32>
    %289 = tpu.matmul %275, %4, %cst_83 {dimension_numbers = #tpu.dot_dimension_numbers<[1], [0], [0], [1], [0, 0, 1, 1], [], []>} : vector<8x128xf32>, vector<128x384xf32>, vector<8x384xf32> -> vector<8x384xf32>
    %290 = arith.addf %289, %287 : vector<8x384xf32>
    %291 = vector.extract_strided_slice %290 {offsets = [0, 0], sizes = [8, 128], strides = [1, 1]} : vector<8x384xf32> to vector<8x128xf32>
    %292 = vector.extract_strided_slice %290 {offsets = [0, 128], sizes = [8, 128], strides = [1, 1]} : vector<8x384xf32> to vector<8x128xf32>
    %293 = vector.extract_strided_slice %290 {offsets = [0, 256], sizes = [8, 128], strides = [1, 1]} : vector<8x384xf32> to vector<8x128xf32>
    %294 = arith.negf %291 : vector<8x128xf32>
    %295 = math.exp %294 : vector<8x128xf32>
    %cst_84 = arith.constant 1.000000e+00 : f32
    %296 = vector.broadcast %cst_84 : f32 to vector<8x128xf32>
    %297 = arith.addf %296, %295 : vector<8x128xf32>
    %298 = arith.divf %296, %297 : vector<8x128xf32>
    %299 = vector.broadcast %3 : f32 to vector<8x128xf32>
    %300 = arith.mulf %299, %298 : vector<8x128xf32>
    %301 = arith.negf %292 : vector<8x128xf32>
    %302 = math.exp %301 : vector<8x128xf32>
    %cst_85 = arith.constant 1.000000e+00 : f32
    %303 = vector.broadcast %cst_85 : f32 to vector<8x128xf32>
    %304 = arith.addf %303, %302 : vector<8x128xf32>
    %305 = arith.divf %303, %304 : vector<8x128xf32>
    %306 = vector.broadcast %3 : f32 to vector<8x128xf32>
    %307 = arith.mulf %306, %305 : vector<8x128xf32>
    %cst_86 = arith.constant 1.000000e+00 : f32
    %308 = vector.broadcast %cst_86 : f32 to vector<8x128xf32>
    %309 = arith.subf %308, %307 : vector<8x128xf32>
    %310 = arith.mulf %309, %267 : vector<8x128xf32>
    %311 = math.tanh %293 : vector<8x128xf32>
    %312 = arith.mulf %307, %311 : vector<8x128xf32>
    %313 = arith.addf %310, %312 : vector<8x128xf32>
    %cst_87 = arith.constant dense<0.000000e+00> : vector<8x128xf32>
    %314 = tpu.matmul %313, %5, %cst_87 {dimension_numbers = #tpu.dot_dimension_numbers<[1], [0], [0], [1], [0, 0, 1, 1], [], []>} : vector<8x128xf32>, vector<128x128xf32>, vector<8x128xf32> -> vector<8x128xf32>
    %315 = arith.addf %314, %288 : vector<8x128xf32>
    %cst_88 = arith.constant 1.000000e+00 : f32
    %316 = vector.broadcast %cst_88 : f32 to vector<8x128xf32>
    %317 = arith.subf %316, %300 : vector<8x128xf32>
    %318 = arith.mulf %317, %275 : vector<8x128xf32>
    %319 = math.tanh %315 : vector<8x128xf32>
    %320 = arith.mulf %300, %319 : vector<8x128xf32>
    %321 = arith.addf %318, %320 : vector<8x128xf32>
    %322 = arith.index_cast %c6_i32 : i32 to index
    %c0_89 = arith.constant 0 : index
    %c0_90 = arith.constant 0 : index
    %323 = vector.load %arg6[%322, %c0_89, %c0_90] : memref<8x8x128xf32, #tpu.memory_space<vmem>>, vector<1x8x128xf32>
    %324 = vector.shape_cast %323 : vector<1x8x128xf32> to vector<8x128xf32>
    %325 = vector.shape_cast %321 : vector<8x128xf32> to vector<1x8x128xf32>
    tpu.vector_store %arg6[%322, %c0_89, %c0_90], %325 {strides = array<i32>} : memref<8x8x128xf32, #tpu.memory_space<vmem>>, vector<1x8x128xf32>,
    %326 = arith.index_cast %c6_i32 : i32 to index
    %c0_91 = arith.constant 0 : index
    %c0_92 = arith.constant 0 : index
    %327 = vector.load %arg7[%326, %c0_91, %c0_92] : memref<8x8x128xf32, #tpu.memory_space<vmem>>, vector<1x8x128xf32>
    %328 = vector.shape_cast %327 : vector<1x8x128xf32> to vector<8x128xf32>
    %329 = vector.shape_cast %313 : vector<8x128xf32> to vector<1x8x128xf32>
    tpu.vector_store %arg7[%326, %c0_91, %c0_92], %329 {strides = array<i32>} : memref<8x8x128xf32, #tpu.memory_space<vmem>>, vector<1x8x128xf32>,
    %c7_i32 = arith.constant 7 : i32
    %330 = arith.index_cast %c7_i32 : i32 to index
    %c0_93 = arith.constant 0 : index
    %c0_94 = arith.constant 0 : index
    %331 = vector.load %arg3[%330, %c0_93, %c0_94] : memref<8x8x512xf32, #tpu.memory_space<vmem>>, vector<1x8x512xf32>
    %332 = vector.shape_cast %331 : vector<1x8x512xf32> to vector<8x512xf32>
    %333 = vector.extract_strided_slice %332 {offsets = [0, 0], sizes = [8, 384], strides = [1, 1]} : vector<8x512xf32> to vector<8x384xf32>
    %334 = vector.extract_strided_slice %332 {offsets = [0, 384], sizes = [8, 128], strides = [1, 1]} : vector<8x512xf32> to vector<8x128xf32>
    %cst_95 = arith.constant dense<0.000000e+00> : vector<8x384xf32>
    %335 = tpu.matmul %321, %4, %cst_95 {dimension_numbers = #tpu.dot_dimension_numbers<[1], [0], [0], [1], [0, 0, 1, 1], [], []>} : vector<8x128xf32>, vector<128x384xf32>, vector<8x384xf32> -> vector<8x384xf32>
    %336 = arith.addf %335, %333 : vector<8x384xf32>
    %337 = vector.extract_strided_slice %336 {offsets = [0, 0], sizes = [8, 128], strides = [1, 1]} : vector<8x384xf32> to vector<8x128xf32>
    %338 = vector.extract_strided_slice %336 {offsets = [0, 128], sizes = [8, 128], strides = [1, 1]} : vector<8x384xf32> to vector<8x128xf32>
    %339 = vector.extract_strided_slice %336 {offsets = [0, 256], sizes = [8, 128], strides = [1, 1]} : vector<8x384xf32> to vector<8x128xf32>
    %340 = arith.negf %337 : vector<8x128xf32>
    %341 = math.exp %340 : vector<8x128xf32>
    %cst_96 = arith.constant 1.000000e+00 : f32
    %342 = vector.broadcast %cst_96 : f32 to vector<8x128xf32>
    %343 = arith.addf %342, %341 : vector<8x128xf32>
    %344 = arith.divf %342, %343 : vector<8x128xf32>
    %345 = vector.broadcast %3 : f32 to vector<8x128xf32>
    %346 = arith.mulf %345, %344 : vector<8x128xf32>
    %347 = arith.negf %338 : vector<8x128xf32>
    %348 = math.exp %347 : vector<8x128xf32>
    %cst_97 = arith.constant 1.000000e+00 : f32
    %349 = vector.broadcast %cst_97 : f32 to vector<8x128xf32>
    %350 = arith.addf %349, %348 : vector<8x128xf32>
    %351 = arith.divf %349, %350 : vector<8x128xf32>
    %352 = vector.broadcast %3 : f32 to vector<8x128xf32>
    %353 = arith.mulf %352, %351 : vector<8x128xf32>
    %cst_98 = arith.constant 1.000000e+00 : f32
    %354 = vector.broadcast %cst_98 : f32 to vector<8x128xf32>
    %355 = arith.subf %354, %353 : vector<8x128xf32>
    %356 = arith.mulf %355, %313 : vector<8x128xf32>
    %357 = math.tanh %339 : vector<8x128xf32>
    %358 = arith.mulf %353, %357 : vector<8x128xf32>
    %359 = arith.addf %356, %358 : vector<8x128xf32>
    %cst_99 = arith.constant dense<0.000000e+00> : vector<8x128xf32>
    %360 = tpu.matmul %359, %5, %cst_99 {dimension_numbers = #tpu.dot_dimension_numbers<[1], [0], [0], [1], [0, 0, 1, 1], [], []>} : vector<8x128xf32>, vector<128x128xf32>, vector<8x128xf32> -> vector<8x128xf32>
    %361 = arith.addf %360, %334 : vector<8x128xf32>
    %cst_100 = arith.constant 1.000000e+00 : f32
    %362 = vector.broadcast %cst_100 : f32 to vector<8x128xf32>
    %363 = arith.subf %362, %346 : vector<8x128xf32>
    %364 = arith.mulf %363, %321 : vector<8x128xf32>
    %365 = math.tanh %361 : vector<8x128xf32>
    %366 = arith.mulf %346, %365 : vector<8x128xf32>
    %367 = arith.addf %364, %366 : vector<8x128xf32>
    %368 = arith.index_cast %c7_i32 : i32 to index
    %c0_101 = arith.constant 0 : index
    %c0_102 = arith.constant 0 : index
    %369 = vector.load %arg6[%368, %c0_101, %c0_102] : memref<8x8x128xf32, #tpu.memory_space<vmem>>, vector<1x8x128xf32>
    %370 = vector.shape_cast %369 : vector<1x8x128xf32> to vector<8x128xf32>
    %371 = vector.shape_cast %367 : vector<8x128xf32> to vector<1x8x128xf32>
    tpu.vector_store %arg6[%368, %c0_101, %c0_102], %371 {strides = array<i32>} : memref<8x8x128xf32, #tpu.memory_space<vmem>>, vector<1x8x128xf32>,
    %372 = arith.index_cast %c7_i32 : i32 to index
    %c0_103 = arith.constant 0 : index
    %c0_104 = arith.constant 0 : index
    %373 = vector.load %arg7[%372, %c0_103, %c0_104] : memref<8x8x128xf32, #tpu.memory_space<vmem>>, vector<1x8x128xf32>
    %374 = vector.shape_cast %373 : vector<1x8x128xf32> to vector<8x128xf32>
    %375 = vector.shape_cast %359 : vector<8x128xf32> to vector<1x8x128xf32>
    tpu.vector_store %arg7[%372, %c0_103, %c0_104], %375 {strides = array<i32>} : memref<8x8x128xf32, #tpu.memory_space<vmem>>, vector<1x8x128xf32>,
    %c8_i32 = arith.constant 8 : i32
    %c0_105 = arith.constant 0 : index
    %c0_106 = arith.constant 0 : index
    %376 = vector.load %arg8[%c0_105, %c0_106] : memref<8x128xf32, #tpu.memory_space<vmem>>, vector<8x128xf32>
    tpu.vector_store %arg8[%c0_105, %c0_106], %367 {strides = array<i32>} : memref<8x128xf32, #tpu.memory_space<vmem>>, vector<8x128xf32>,
    %c0_107 = arith.constant 0 : index
    %c0_108 = arith.constant 0 : index
    %377 = vector.load %arg9[%c0_107, %c0_108] : memref<8x128xf32, #tpu.memory_space<vmem>>, vector<8x128xf32>
    tpu.vector_store %arg9[%c0_107, %c0_108], %359 {strides = array<i32>} : memref<8x128xf32, #tpu.memory_space<vmem>>, vector<8x128xf32>,
    return
  }
  func.func @transform_0(%arg0: i32, %arg1: i32) -> i32 {
    %c0_i32 = arith.constant 0 : i32
    %c0_i32_0 = arith.constant 0 : i32
    return %c0_i32 : i32
  }
  func.func @transform_1(%arg0: i32, %arg1: i32) -> (i32, i32, i32) {
    %c0_i32 = arith.constant 0 : i32
    %c0_i32_0 = arith.constant 0 : i32
    return %arg1, %arg0, %c0_i32 : i32, i32, i32
  }
  func.func @transform_2(%arg0: i32, %arg1: i32) -> (i32, i32) {
    %c0_i32 = arith.constant 0 : i32
    %c0_i32_0 = arith.constant 0 : i32
    %c0_i32_1 = arith.constant 0 : i32
    return %c0_i32, %c0_i32_0 : i32, i32
  }
  func.func @transform_3(%arg0: i32, %arg1: i32) -> (i32, i32) {
    %c0_i32 = arith.constant 0 : i32
    %c0_i32_0 = arith.constant 0 : i32
    %c0_i32_1 = arith.constant 0 : i32
    return %c0_i32, %c0_i32_0 : i32, i32
  }
  func.func @transform_4(%arg0: i32, %arg1: i32) -> (i32, i32, i32) {
    %c0_i32 = arith.constant 0 : i32
    %c0_i32_0 = arith.constant 0 : i32
    return %arg1, %arg0, %c0_i32 : i32, i32, i32
  }
  func.func @transform_5(%arg0: i32, %arg1: i32) -> (i32, i32, i32) {
    %c0_i32 = arith.constant 0 : i32
    %c0_i32_0 = arith.constant 0 : i32
    return %arg1, %arg0, %c0_i32 : i32, i32, i32
  }
}

</mosaic_0001>

<llo_original>
// kernel: tpu_custom_call.1
$region0: #{tpu_custom_call.1}
  #allocation0 [shape = 'u32[]', space=smem, size = 0x4, offset = 0x4, fixed_abs, tag = 'smem constant byte address 0x4 - core index']
  #allocation1 [shape = 'u32[72,128]{1,0:T(1,128)}', space=vmem, size = 0x9000, scoped, tag = 'internal scratch']
  #allocation2 [shape = 'f32[8,128]{1,0:T(8,128)}', space=vmem, size = 0x1000, scoped, tag = 'scratch operand']
  #allocation3 [shape = 'f32[8,128]{1,0:T(8,128)}', space=vmem, size = 0x1000, scoped, tag = 'scratch operand']
  #allocation4 [shape = 'f32[1]{0:T(128)S(6)}', space=smem, size = 0x200, scoped, tag = 'scoped memory for tpu_custom_call.1']
  %s0 = inlined_call_operand.<no memory space> [shape: f32[1], index: 0, kind: input, shape index: {}]
  %s1 = inlined_call_operand.hbm [shape: f32[8,8,512], index: 1, kind: input, shape index: {}]
  %s2 = inlined_call_operand.hbm [shape: f32[128,384], index: 2, kind: input, shape index: {}]
  %s3 = inlined_call_operand.hbm [shape: f32[128,128], index: 3, kind: input, shape index: {}]
  %s4 = inlined_call_operand.hbm [shape: f32[8,8,128], index: 4, kind: output, shape index: {0}]
  %s5 = inlined_call_operand.hbm [shape: f32[8,8,128], index: 5, kind: output, shape index: {1}]
  %6 = xla_tuple %s4, %s5
  %s7 = sld [smem:[#allocation0]]
  $region50: #{tpu_custom_call.1} parent=0
    _
  %s9 = ssub.s32 1, %s7
  %s10 = scalar_select 0, %s9, %s7
  %11 = sst [smem:[#allocation4]] %s0
  $region1: #{tpu_custom_call.1} parent=0
    #allocation5 [shape = 'u8[131072]{0}', space=vmem, size = 0x20000, scoped, tag = 'input window, operand 1, single buffered']
    #allocation6 [shape = 's32[1]{0}', space=sflag, size = 0x4, scoped, tag = 'scoped memory for tpu_custom_call.1']
    #allocation7 [shape = 's32[1]{0}', space=sflag, size = 0x4, scoped, tag = 'scoped memory for tpu_custom_call.1']
    #allocation8 [shape = 'u8[196608]{0}', space=vmem, size = 0x30000, scoped, tag = 'input window, operand 2, single buffered']
    #allocation9 [shape = 's32[1]{0}', space=sflag, size = 0x4, scoped, tag = 'scoped memory for tpu_custom_call.1']
    #allocation10 [shape = 'u8[65536]{0}', space=vmem, size = 0x10000, scoped, tag = 'input window, operand 3, single buffered']
    #allocation11 [shape = 'u8[32768]{0}', space=vmem, size = 0x8000, scoped, tag = 'output window, operand 0, single buffered']
    #allocation12 [shape = 'u8[32768]{0}', space=vmem, size = 0x8000, scoped, tag = 'output window, operand 1, single buffered']
    #allocation13 [shape = 's32[1]{0}', space=sflag, size = 0x4, scoped, tag = 'scoped memory for tpu_custom_call.1']
    %12 = vsyncpa [#allocation6], 0
    %13 = vsyncpa [#allocation9], 0
    %14 = vsyncpa [#allocation7], 0
    %15 = vsyncpa [#allocation13], 0
    // Predicated region
    $region2: #{tpu_custom_call.1} parent=1 // pred_check
      _
    $region3: #{tpu_custom_call.1} parent=1 // pred_check_branch
      %17 = sbr.rel (0) target = $region5
    $region4: #{tpu_custom_call.1} parent=1 // pred_region
      _
    $region5: #{tpu_custom_call.1} parent=1 // pred_fallthru
      _
    // Predicated region
    $region6: #{tpu_custom_call.1} parent=1 // pred_check
      _
    $region7: #{tpu_custom_call.1} parent=1 // pred_check_branch
      %19 = sbr.rel (0) target = $region9
    $region8: #{tpu_custom_call.1} parent=1 // pred_region
      %21 = vsyncadd [#allocation6], 0
      %s22 = sshll.u32 %s1, 4
      %s23 = int_to_ptr.hbm [resolvable:$true] %s22
      %s24 = sshll.u32 [#allocation5], 4
      %s25 = int_to_ptr.vmem [resolvable:$true] %s24
      %30 = dma.hbm_to_vmem [thread:$0]  %s23, 4096, %s25, [#allocation6], 512, 512, 32
    $region9: #{tpu_custom_call.1} parent=1 // pred_fallthru
      _
    // Predicated region
    $region10: #{tpu_custom_call.1} parent=1 // pred_check
      _
    $region11: #{tpu_custom_call.1} parent=1 // pred_check_branch
      %32 = sbr.rel (0) target = $region13
    $region12: #{tpu_custom_call.1} parent=1 // pred_region
      %34 = vsyncadd [#allocation9], 0
      %s35 = sshll.u32 %s2, 4
      %s36 = int_to_ptr.hbm [resolvable:$true] %s35
      %s37 = sshll.u32 [#allocation8], 4
      %s38 = int_to_ptr.vmem [resolvable:$true] %s37
      %43 = dma.hbm_to_vmem [thread:$0]  %s36, 6144, %s38, [#allocation9], 384, 384, 24
    $region13: #{tpu_custom_call.1} parent=1 // pred_fallthru
      _
    // Predicated region
    $region14: #{tpu_custom_call.1} parent=1 // pred_check
      _
    $region15: #{tpu_custom_call.1} parent=1 // pred_check_branch
      %45 = sbr.rel (0) target = $region17
    $region16: #{tpu_custom_call.1} parent=1 // pred_region
      %47 = vsyncadd [#allocation9], 0
      %s48 = sshll.u32 %s3, 4
      %s49 = int_to_ptr.hbm [resolvable:$true] %s48
      %s50 = sshll.u32 [#allocation10], 4
      %s51 = int_to_ptr.vmem [resolvable:$true] %s50
      %56 = dma.hbm_to_vmem [thread:$0]  %s49, 2048, %s51, [#allocation9], 128, 128, 8
    $region17: #{tpu_custom_call.1} parent=1 // pred_fallthru
      _
    // Predicated region
    $region18: #{tpu_custom_call.1} parent=1 // pred_check
      _
    $region19: #{tpu_custom_call.1} parent=1 // pred_check_branch
      %58 = sbr.rel (0) target = $region21
    $region20: #{tpu_custom_call.1} parent=1 // pred_region
      %60 = dma.done [#allocation6], 4096
    $region21: #{tpu_custom_call.1} parent=1 // pred_fallthru
      _
    // Predicated region
    $region22: #{tpu_custom_call.1} parent=1 // pred_check
      _
    $region23: #{tpu_custom_call.1} parent=1 // pred_check_branch
      %62 = sbr.rel (0) target = $region25
    $region24: #{tpu_custom_call.1} parent=1 // pred_region
      %64 = dma.done [#allocation9], 6144
    $region25: #{tpu_custom_call.1} parent=1 // pred_fallthru
      _
    // Predicated region
    $region26: #{tpu_custom_call.1} parent=1 // pred_check
      _
    $region27: #{tpu_custom_call.1} parent=1 // pred_check_branch
      %66 = sbr.rel (0) target = $region29
    $region28: #{tpu_custom_call.1} parent=1 // pred_region
      %68 = dma.done [#allocation9], 2048
    $region29: #{tpu_custom_call.1} parent=1 // pred_fallthru
      _
    %p69 = scmp.eq.s32.totalorder 0, 0
    // Predicated region
    $region30: #{tpu_custom_call.1} parent=1 // pred_check
      %p70 = pneg %p69
    $region31: #{tpu_custom_call.1} parent=1 // pred_check_branch
      %72 = sbr.rel (%p70) target = $region33
    $region32: #{tpu_custom_call.1} parent=1 // pred_region
      %73 = vst [vmem:[#allocation2] sm:$0xff] 0.0
      %74 = vst [vmem:[#allocation3] sm:$0xff] 0.0
    $region33: #{tpu_custom_call.1} parent=1 // pred_fallthru
      _
    %s75 = sld [smem:[#allocation4]]
    %v76 = vld [vmem:[#allocation8] sm:$0xff]
    %v77 = vld [vmem:[#allocation8 + $0x8] sm:$0xff]
    %v78 = vld [vmem:[#allocation8 + $0x10] sm:$0xff]
    %v79 = vld [vmem:[#allocation8 + $0x18] sm:$0xff]
    %v80 = vld [vmem:[#allocation8 + $0x20] sm:$0xff]
    %v81 = vld [vmem:[#allocation8 + $0x28] sm:$0xff]
    %v82 = vld [vmem:[#allocation8 + $0x30] sm:$0xff]
    %v83 = vld [vmem:[#allocation8 + $0x38] sm:$0xff]
    %v84 = vld [vmem:[#allocation8 + $0x40] sm:$0xff]
    %v85 = vld [vmem:[#allocation8 + $0x48] sm:$0xff]
    %v86 = vld [vmem:[#allocation8 + $0x50] sm:$0xff]
    %v87 = vld [vmem:[#allocation8 + $0x58] sm:$0xff]
    %v88 = vld [vmem:[#allocation8 + $0x60] sm:$0xff]
    %v89 = vld [vmem:[#allocation8 + $0x68] sm:$0xff]
    %v90 = vld [vmem:[#allocation8 + $0x70] sm:$0xff]
    %v91 = vld [vmem:[#allocation8 + $0x78] sm:$0xff]
    %v92 = vld [vmem:[#allocation8 + $0x80] sm:$0xff]
    %v93 = vld [vmem:[#allocation8 + $0x88] sm:$0xff]
    %v94 = vld [vmem:[#allocation8 + $0x90] sm:$0xff]
    %v95 = vld [vmem:[#allocation8 + $0x98] sm:$0xff]
    %v96 = vld [vmem:[#allocation8 + $0xa0] sm:$0xff]
    %v97 = vld [vmem:[#allocation8 + $0xa8] sm:$0xff]
    %v98 = vld [vmem:[#allocation8 + $0xb0] sm:$0xff]
    %v99 = vld [vmem:[#allocation8 + $0xb8] sm:$0xff]
    %v100 = vld [vmem:[#allocation8 + $0xc0] sm:$0xff]
    %v101 = vld [vmem:[#allocation8 + $0xc8] sm:$0xff]
    %v102 = vld [vmem:[#allocation8 + $0xd0] sm:$0xff]
    %v103 = vld [vmem:[#allocation8 + $0xd8] sm:$0xff]
    %v104 = vld [vmem:[#allocation8 + $0xe0] sm:$0xff]
    %v105 = vld [vmem:[#allocation8 + $0xe8] sm:$0xff]
    %v106 = vld [vmem:[#allocation8 + $0xf0] sm:$0xff]
    %v107 = vld [vmem:[#allocation8 + $0xf8] sm:$0xff]
    %v108 = vld [vmem:[#allocation8 + $0x100] sm:$0xff]
    %v109 = vld [vmem:[#allocation8 + $0x108] sm:$0xff]
    %v110 = vld [vmem:[#allocation8 + $0x110] sm:$0xff]
    %v111 = vld [vmem:[#allocation8 + $0x118] sm:$0xff]
    %v112 = vld [vmem:[#allocation8 + $0x120] sm:$0xff]
    %v113 = vld [vmem:[#allocation8 + $0x128] sm:$0xff]
    %v114 = vld [vmem:[#allocation8 + $0x130] sm:$0xff]
    %v115 = vld [vmem:[#allocation8 + $0x138] sm:$0xff]
    %v116 = vld [vmem:[#allocation8 + $0x140] sm:$0xff]
    %v117 = vld [vmem:[#allocation8 + $0x148] sm:$0xff]
    %v118 = vld [vmem:[#allocation8 + $0x150] sm:$0xff]
    %v119 = vld [vmem:[#allocation8 + $0x158] sm:$0xff]
    %v120 = vld [vmem:[#allocation8 + $0x160] sm:$0xff]
    %v121 = vld [vmem:[#allocation8 + $0x168] sm:$0xff]
    %v122 = vld [vmem:[#allocation8 + $0x170] sm:$0xff]
    %v123 = vld [vmem:[#allocation8 + $0x178] sm:$0xff]
    %v124 = vld [vmem:[#allocation10] sm:$0xff]
    %v125 = vld [vmem:[#allocation10 + $0x8] sm:$0xff]
    %v126 = vld [vmem:[#allocation10 + $0x10] sm:$0xff]
    %v127 = vld [vmem:[#allocation10 + $0x18] sm:$0xff]
    %v128 = vld [vmem:[#allocation10 + $0x20] sm:$0xff]
    %v129 = vld [vmem:[#allocation10 + $0x28] sm:$0xff]
    %v130 = vld [vmem:[#allocation10 + $0x30] sm:$0xff]
    %v131 = vld [vmem:[#allocation10 + $0x38] sm:$0xff]
    %v132 = vld [vmem:[#allocation10 + $0x40] sm:$0xff]
    %v133 = vld [vmem:[#allocation10 + $0x48] sm:$0xff]
    %v134 = vld [vmem:[#allocation10 + $0x50] sm:$0xff]
    %v135 = vld [vmem:[#allocation10 + $0x58] sm:$0xff]
    %v136 = vld [vmem:[#allocation10 + $0x60] sm:$0xff]
    %v137 = vld [vmem:[#allocation10 + $0x68] sm:$0xff]
    %v138 = vld [vmem:[#allocation10 + $0x70] sm:$0xff]
    %v139 = vld [vmem:[#allocation10 + $0x78] sm:$0xff]
    %v140 = vld [vmem:[#allocation2] sm:$0xff]
    %v141 = vld [vmem:[#allocation3] sm:$0xff]
    %v142 = vld [vmem:[#allocation5] sm:$0xff]
    %v143 = vld [vmem:[#allocation5 + $0x8] sm:$0xff]
    %v144 = vld [vmem:[#allocation5 + $0x10] sm:$0xff]
    %v145 = vld [vmem:[#allocation5 + $0x18] sm:$0xff]
    %146 = vmatpush.msra.mxu0 %v121
    %147 = vmatpush.msra.mxu0 %v118
    %148 = vmatpush.msra.mxu0 %v115
    %149 = vmatpush.msra.mxu0 %v112
    %150 = vmatpush.msra.mxu0 %v109
    %151 = vmatpush.msra.mxu0 %v106
    %152 = vmatpush.msra.mxu0 %v103
    %153 = vmatpush.msra.mxu0 %v100
    %154 = vmatpush.msra.mxu0 %v97
    %155 = vmatpush.msra.mxu0 %v94
    %156 = vmatpush.msra.mxu0 %v91
    %157 = vmatpush.msra.mxu0 %v88
    %158 = vmatpush.msra.mxu0 %v85
    %159 = vmatpush.msra.mxu0 %v82
    %160 = vmatpush.msra.mxu0 %v79
    %161 = vmatpush.msra.mxu0 %v76
    %162 = vmatmul.f32.gmra.mxu0 %v140
    %v163 = vpop.f32.mrf.mxu0
    %v164 = vadd.f32 %v142, %v163
    %165 = vdwg.mxu0
    %166 = vmatpush.msra.mxu0 %v122
    %167 = vmatpush.msra.mxu0 %v119
    %168 = vmatpush.msra.mxu0 %v116
    %169 = vmatpush.msra.mxu0 %v113
    %170 = vmatpush.msra.mxu0 %v110
    %171 = vmatpush.msra.mxu0 %v107
    %172 = vmatpush.msra.mxu0 %v104
    %173 = vmatpush.msra.mxu0 %v101
    %174 = vmatpush.msra.mxu0 %v98
    %175 = vmatpush.msra.mxu0 %v95
    %176 = vmatpush.msra.mxu0 %v92
    %177 = vmatpush.msra.mxu0 %v89
    %178 = vmatpush.msra.mxu0 %v86
    %179 = vmatpush.msra.mxu0 %v83
    %180 = vmatpush.msra.mxu0 %v80
    %181 = vmatpush.msra.mxu0 %v77
    %182 = vmatmul.f32.gmra.mxu0 %v140
    %v183 = vpop.f32.mrf.mxu0
    %v184 = vadd.f32 %v143, %v183
    %185 = vdwg.mxu0
    %186 = vmatpush.msra.mxu0 %v123
    %187 = vmatpush.msra.mxu0 %v120
    %188 = vmatpush.msra.mxu0 %v117
    %189 = vmatpush.msra.mxu0 %v114
    %190 = vmatpush.msra.mxu0 %v111
    %191 = vmatpush.msra.mxu0 %v108
    %192 = vmatpush.msra.mxu0 %v105
    %193 = vmatpush.msra.mxu0 %v102
    %194 = vmatpush.msra.mxu0 %v99
    %195 = vmatpush.msra.mxu0 %v96
    %196 = vmatpush.msra.mxu0 %v93
    %197 = vmatpush.msra.mxu0 %v90
    %198 = vmatpush.msra.mxu0 %v87
    %199 = vmatpush.msra.mxu0 %v84
    %200 = vmatpush.msra.mxu0 %v81
    %201 = vmatpush.msra.mxu0 %v78
    %202 = vmatmul.f32.gmra.mxu0 %v140
    %v203 = vpop.f32.mrf.mxu0
    %v204 = vadd.f32 %v144, %v203
    %205 = vdwg.mxu0
    %v206 = vxor.u32 %v164, 2147483648
    %v207 = vmul.f32 %v206, 1.442695
    %v208 = vpow.pop %v207
    %v209 = vadd.f32 %v208, 1.0
    %v210 = vrcp.pop %v209
    %v211 = vmul.f32 %v209, %v210
    %v212 = vsub.f32 1.0, %v211
    %v213 = vmul.f32 %v210, %v212
    %v214 = vadd.f32 %v210, %v213
    %vm215 = vweird.f32 %v209
    %vm216 = vweird.f32 %v210
    %vm217 = vmor %vm215, %vm216
    %v218 = vsel %vm217, %v210, %v214
    %v219 = vand.u32 2147483647, %v209
    %vm220 = vcmp.eq.f32.partialorder %v219, 8.507059e+37
    %v221 = vand.u32 %v209, 2147483648
    %v222 = vor.u32 1.1754944e-38, %v221
    %v223 = vsel %vm220, %v222, %v218
    %v224 = vmul.f32 1.0, %v223
    %v225 = vstv %s75
    %v226 = vmul.f32 %v225, %v224
    %v227 = vxor.u32 %v184, 2147483648
    %v228 = vmul.f32 %v227, 1.442695
    %v229 = vpow.pop %v228
    %v230 = vadd.f32 %v229, 1.0
    %v231 = vrcp.pop %v230
    %v232 = vmul.f32 %v230, %v231
    %v233 = vsub.f32 1.0, %v232
    %v234 = vmul.f32 %v231, %v233
    %v235 = vadd.f32 %v231, %v234
    %vm236 = vweird.f32 %v230
    %vm237 = vweird.f32 %v231
    %vm238 = vmor %vm236, %vm237
    %v239 = vsel %vm238, %v231, %v235
    %v240 = vand.u32 2147483647, %v230
    %vm241 = vcmp.eq.f32.partialorder %v240, 8.507059e+37
    %v242 = vand.u32 %v230, 2147483648
    %v243 = vor.u32 1.1754944e-38, %v242
    %v244 = vsel %vm241, %v243, %v239
    %v245 = vmul.f32 1.0, %v244
    %v246 = vmul.f32 %v225, %v245
    %v247 = vsub.f32 1.0, %v246
    %v248 = vmul.f32 %v247, %v141
    %v249 = vtanh.pop %v204
    %v250 = vmul.f32 %v246, %v249
    %v251 = vadd.f32 %v248, %v250
    %252 = vmatpush.msra.mxu0 %v139
    %253 = vmatpush.msra.mxu0 %v138
    %254 = vmatpush.msra.mxu0 %v137
    %255 = vmatpush.msra.mxu0 %v136
    %256 = vmatpush.msra.mxu0 %v135
    %257 = vmatpush.msra.mxu0 %v134
    %258 = vmatpush.msra.mxu0 %v133
    %259 = vmatpush.msra.mxu0 %v132
    %260 = vmatpush.msra.mxu0 %v131
    %261 = vmatpush.msra.mxu0 %v130
    %262 = vmatpush.msra.mxu0 %v129
    %263 = vmatpush.msra.mxu0 %v128
    %264 = vmatpush.msra.mxu0 %v127
    %265 = vmatpush.msra.mxu0 %v126
    %266 = vmatpush.msra.mxu0 %v125
    %267 = vmatpush.msra.mxu0 %v124
    %268 = vmatmul.f32.gmra.mxu0 %v251
    %v269 = vpop.f32.mrf.mxu0
    %v270 = vadd.f32 %v145, %v269
    %271 = vdwg.mxu0
    %v272 = vsub.f32 1.0, %v226
    %v273 = vmul.f32 %v272, %v140
    %v274 = vtanh.pop %v270
    %v275 = vmul.f32 %v226, %v274
    %v276 = vadd.f32 %v273, %v275
    %277 = vst [vmem:[#allocation11] sm:$0xff] %v276
    %278 = vst [vmem:[#allocation12] sm:$0xff] %v251
    %s279 = scalar_lea.vmem [#allocation5], 32
    %v280 = vld [vmem:[%s279] sm:$0xff]
    %v281 = vld [vmem:[%s279 + $0x8] sm:$0xff]
    %v282 = vld [vmem:[%s279 + $0x10] sm:$0xff]
    %v283 = vld [vmem:[%s279 + $0x18] sm:$0xff]
    %284 = vmatpush.msra.mxu0 %v121
    %285 = vmatpush.msra.mxu0 %v118
    %286 = vmatpush.msra.mxu0 %v115
    %287 = vmatpush.msra.mxu0 %v112
    %288 = vmatpush.msra.mxu0 %v109
    %289 = vmatpush.msra.mxu0 %v106
    %290 = vmatpush.msra.mxu0 %v103
    %291 = vmatpush.msra.mxu0 %v100
    %292 = vmatpush.msra.mxu0 %v97
    %293 = vmatpush.msra.mxu0 %v94
    %294 = vmatpush.msra.mxu0 %v91
    %295 = vmatpush.msra.mxu0 %v88
    %296 = vmatpush.msra.mxu0 %v85
    %297 = vmatpush.msra.mxu0 %v82
    %298 = vmatpush.msra.mxu0 %v79
    %299 = vmatpush.msra.mxu0 %v76
    %300 = vmatmul.f32.gmra.mxu0 %v276
    %v301 = vpop.f32.mrf.mxu0
    %v302 = vadd.f32 %v280, %v301
    %303 = vdwg.mxu0
    %304 = vmatpush.msra.mxu0 %v122
    %305 = vmatpush.msra.mxu0 %v119
    %306 = vmatpush.msra.mxu0 %v116
    %307 = vmatpush.msra.mxu0 %v113
    %308 = vmatpush.msra.mxu0 %v110
    %309 = vmatpush.msra.mxu0 %v107
    %310 = vmatpush.msra.mxu0 %v104
    %311 = vmatpush.msra.mxu0 %v101
    %312 = vmatpush.msra.mxu0 %v98
    %313 = vmatpush.msra.mxu0 %v95
    %314 = vmatpush.msra.mxu0 %v92
    %315 = vmatpush.msra.mxu0 %v89
    %316 = vmatpush.msra.mxu0 %v86
    %317 = vmatpush.msra.mxu0 %v83
    %318 = vmatpush.msra.mxu0 %v80
    %319 = vmatpush.msra.mxu0 %v77
    %320 = vmatmul.f32.gmra.mxu0 %v276
    %v321 = vpop.f32.mrf.mxu0
    %v322 = vadd.f32 %v281, %v321
    %323 = vdwg.mxu0
    %324 = vmatpush.msra.mxu0 %v123
    %325 = vmatpush.msra.mxu0 %v120
    %326 = vmatpush.msra.mxu0 %v117
    %327 = vmatpush.msra.mxu0 %v114
    %328 = vmatpush.msra.mxu0 %v111
    %329 = vmatpush.msra.mxu0 %v108
    %330 = vmatpush.msra.mxu0 %v105
    %331 = vmatpush.msra.mxu0 %v102
    %332 = vmatpush.msra.mxu0 %v99
    %333 = vmatpush.msra.mxu0 %v96
    %334 = vmatpush.msra.mxu0 %v93
    %335 = vmatpush.msra.mxu0 %v90
    %336 = vmatpush.msra.mxu0 %v87
    %337 = vmatpush.msra.mxu0 %v84
    %338 = vmatpush.msra.mxu0 %v81
    %339 = vmatpush.msra.mxu0 %v78
    %340 = vmatmul.f32.gmra.mxu0 %v276
    %v341 = vpop.f32.mrf.mxu0
    %v342 = vadd.f32 %v282, %v341
    %343 = vdwg.mxu0
    %v344 = vxor.u32 %v302, 2147483648
    %v345 = vmul.f32 %v344, 1.442695
    %v346 = vpow.pop %v345
    %v347 = vadd.f32 %v346, 1.0
    %v348 = vrcp.pop %v347
    %v349 = vmul.f32 %v347, %v348
    %v350 = vsub.f32 1.0, %v349
    %v351 = vmul.f32 %v348, %v350
    %v352 = vadd.f32 %v348, %v351
    %vm353 = vweird.f32 %v347
    %vm354 = vweird.f32 %v348
    %vm355 = vmor %vm353, %vm354
    %v356 = vsel %vm355, %v348, %v352
    %v357 = vand.u32 2147483647, %v347
    %vm358 = vcmp.eq.f32.partialorder %v357, 8.507059e+37
    %v359 = vand.u32 %v347, 2147483648
    %v360 = vor.u32 1.1754944e-38, %v359
    %v361 = vsel %vm358, %v360, %v356
    %v362 = vmul.f32 1.0, %v361
    %v363 = vmul.f32 %v225, %v362
    %v364 = vxor.u32 %v322, 2147483648
    %v365 = vmul.f32 %v364, 1.442695
    %v366 = vpow.pop %v365
    %v367 = vadd.f32 %v366, 1.0
    %v368 = vrcp.pop %v367
    %v369 = vmul.f32 %v367, %v368
    %v370 = vsub.f32 1.0, %v369
    %v371 = vmul.f32 %v368, %v370
    %v372 = vadd.f32 %v368, %v371
    %vm373 = vweird.f32 %v367
    %vm374 = vweird.f32 %v368
    %vm375 = vmor %vm373, %vm374
    %v376 = vsel %vm375, %v368, %v372
    %v377 = vand.u32 2147483647, %v367
    %vm378 = vcmp.eq.f32.partialorder %v377, 8.507059e+37
    %v379 = vand.u32 %v367, 2147483648
    %v380 = vor.u32 1.1754944e-38, %v379
    %v381 = vsel %vm378, %v380, %v376
    %v382 = vmul.f32 1.0, %v381
    %v383 = vmul.f32 %v225, %v382
    %v384 = vsub.f32 1.0, %v383
    %v385 = vmul.f32 %v384, %v251
    %v386 = vtanh.pop %v342
    %v387 = vmul.f32 %v383, %v386
    %v388 = vadd.f32 %v385, %v387
    %389 = vmatpush.msra.mxu0 %v139
    %390 = vmatpush.msra.mxu0 %v138
    %391 = vmatpush.msra.mxu0 %v137
    %392 = vmatpush.msra.mxu0 %v136
    %393 = vmatpush.msra.mxu0 %v135
    %394 = vmatpush.msra.mxu0 %v134
    %395 = vmatpush.msra.mxu0 %v133
    %396 = vmatpush.msra.mxu0 %v132
    %397 = vmatpush.msra.mxu0 %v131
    %398 = vmatpush.msra.mxu0 %v130
    %399 = vmatpush.msra.mxu0 %v129
    %400 = vmatpush.msra.mxu0 %v128
    %401 = vmatpush.msra.mxu0 %v127
    %402 = vmatpush.msra.mxu0 %v126
    %403 = vmatpush.msra.mxu0 %v125
    %404 = vmatpush.msra.mxu0 %v124
    %405 = vmatmul.f32.gmra.mxu0 %v388
    %v406 = vpop.f32.mrf.mxu0
    %v407 = vadd.f32 %v283, %v406
    %408 = vdwg.mxu0
    %v409 = vsub.f32 1.0, %v363
    %v410 = vmul.f32 %v409, %v276
    %v411 = vtanh.pop %v407
    %v412 = vmul.f32 %v363, %v411
    %v413 = vadd.f32 %v410, %v412
    %s414 = scalar_lea.vmem [#allocation11], 8
    %415 = vst [vmem:[%s414] sm:$0xff] %v413
    %s416 = scalar_lea.vmem [#allocation12], 8
    %417 = vst [vmem:[%s416] sm:$0xff] %v388
    %s418 = scalar_lea.vmem [#allocation5], 64
    %v419 = vld [vmem:[%s418] sm:$0xff]
    %v420 = vld [vmem:[%s418 + $0x8] sm:$0xff]
    %v421 = vld [vmem:[%s418 + $0x10] sm:$0xff]
    %v422 = vld [vmem:[%s418 + $0x18] sm:$0xff]
    %423 = vmatpush.msra.mxu0 %v121
    %424 = vmatpush.msra.mxu0 %v118
    %425 = vmatpush.msra.mxu0 %v115
    %426 = vmatpush.msra.mxu0 %v112
    %427 = vmatpush.msra.mxu0 %v109
    %428 = vmatpush.msra.mxu0 %v106
    %429 = vmatpush.msra.mxu0 %v103
    %430 = vmatpush.msra.mxu0 %v100
    %431 = vmatpush.msra.mxu0 %v97
    %432 = vmatpush.msra.mxu0 %v94
    %433 = vmatpush.msra.mxu0 %v91
    %434 = vmatpush.msra.mxu0 %v88
    %435 = vmatpush.msra.mxu0 %v85
    %436 = vmatpush.msra.mxu0 %v82
    %437 = vmatpush.msra.mxu0 %v79
    %438 = vmatpush.msra.mxu0 %v76
    %439 = vmatmul.f32.gmra.mxu0 %v413
    %v440 = vpop.f32.mrf.mxu0
    %v441 = vadd.f32 %v419, %v440
    %442 = vdwg.mxu0
    %443 = vmatpush.msra.mxu0 %v122
    %444 = vmatpush.msra.mxu0 %v119
    %445 = vmatpush.msra.mxu0 %v116
    %446 = vmatpush.msra.mxu0 %v113
    %447 = vmatpush.msra.mxu0 %v110
    %448 = vmatpush.msra.mxu0 %v107
    %449 = vmatpush.msra.mxu0 %v104
    %450 = vmatpush.msra.mxu0 %v101
    %451 = vmatpush.msra.mxu0 %v98
    %452 = vmatpush.msra.mxu0 %v95
    %453 = vmatpush.msra.mxu0 %v92
    %454 = vmatpush.msra.mxu0 %v89
    %455 = vmatpush.msra.mxu0 %v86
    %456 = vmatpush.msra.mxu0 %v83
    %457 = vmatpush.msra.mxu0 %v80
    %458 = vmatpush.msra.mxu0 %v77
    %459 = vmatmul.f32.gmra.mxu0 %v413
    %v460 = vpop.f32.mrf.mxu0
    %v461 = vadd.f32 %v420, %v460
    %462 = vdwg.mxu0
    %463 = vmatpush.msra.mxu0 %v123
    %464 = vmatpush.msra.mxu0 %v120
    %465 = vmatpush.msra.mxu0 %v117
    %466 = vmatpush.msra.mxu0 %v114
    %467 = vmatpush.msra.mxu0 %v111
    %468 = vmatpush.msra.mxu0 %v108
    %469 = vmatpush.msra.mxu0 %v105
    %470 = vmatpush.msra.mxu0 %v102
    %471 = vmatpush.msra.mxu0 %v99
    %472 = vmatpush.msra.mxu0 %v96
    %473 = vmatpush.msra.mxu0 %v93
    %474 = vmatpush.msra.mxu0 %v90
    %475 = vmatpush.msra.mxu0 %v87
    %476 = vmatpush.msra.mxu0 %v84
    %477 = vmatpush.msra.mxu0 %v81
    %478 = vmatpush.msra.mxu0 %v78
    %479 = vmatmul.f32.gmra.mxu0 %v413
    %v480 = vpop.f32.mrf.mxu0
    %v481 = vadd.f32 %v421, %v480
    %482 = vdwg.mxu0
    %v483 = vxor.u32 %v441, 2147483648
    %v484 = vmul.f32 %v483, 1.442695
    %v485 = vpow.pop %v484
    %v486 = vadd.f32 %v485, 1.0
    %v487 = vrcp.pop %v486
    %v488 = vmul.f32 %v486, %v487
    %v489 = vsub.f32 1.0, %v488
    %v490 = vmul.f32 %v487, %v489
    %v491 = vadd.f32 %v487, %v490
    %vm492 = vweird.f32 %v486
    %vm493 = vweird.f32 %v487
    %vm494 = vmor %vm492, %vm493
    %v495 = vsel %vm494, %v487, %v491
    %v496 = vand.u32 2147483647, %v486
    %vm497 = vcmp.eq.f32.partialorder %v496, 8.507059e+37
    %v498 = vand.u32 %v486, 2147483648
    %v499 = vor.u32 1.1754944e-38, %v498
    %v500 = vsel %vm497, %v499, %v495
    %v501 = vmul.f32 1.0, %v500
    %v502 = vmul.f32 %v225, %v501
    %v503 = vxor.u32 %v461, 2147483648
    %v504 = vmul.f32 %v503, 1.442695
    %v505 = vpow.pop %v504
    %v506 = vadd.f32 %v505, 1.0
    %v507 = vrcp.pop %v506
    %v508 = vmul.f32 %v506, %v507
    %v509 = vsub.f32 1.0, %v508
    %v510 = vmul.f32 %v507, %v509
    %v511 = vadd.f32 %v507, %v510
    %vm512 = vweird.f32 %v506
    %vm513 = vweird.f32 %v507
    %vm514 = vmor %vm512, %vm513
    %v515 = vsel %vm514, %v507, %v511
    %v516 = vand.u32 2147483647, %v506
    %vm517 = vcmp.eq.f32.partialorder %v516, 8.507059e+37
    %v518 = vand.u32 %v506, 2147483648
    %v519 = vor.u32 1.1754944e-38, %v518
    %v520 = vsel %vm517, %v519, %v515
    %v521 = vmul.f32 1.0, %v520
    %v522 = vmul.f32 %v225, %v521
    %v523 = vsub.f32 1.0, %v522
    %v524 = vmul.f32 %v523, %v388
    %v525 = vtanh.pop %v481
    %v526 = vmul.f32 %v522, %v525
    %v527 = vadd.f32 %v524, %v526
    %528 = vmatpush.msra.mxu0 %v139
    %529 = vmatpush.msra.mxu0 %v138
    %530 = vmatpush.msra.mxu0 %v137
    %531 = vmatpush.msra.mxu0 %v136
    %532 = vmatpush.msra.mxu0 %v135
    %533 = vmatpush.msra.mxu0 %v134
    %534 = vmatpush.msra.mxu0 %v133
    %535 = vmatpush.msra.mxu0 %v132
    %536 = vmatpush.msra.mxu0 %v131
    %537 = vmatpush.msra.mxu0 %v130
    %538 = vmatpush.msra.mxu0 %v129
    %539 = vmatpush.msra.mxu0 %v128
    %540 = vmatpush.msra.mxu0 %v127
    %541 = vmatpush.msra.mxu0 %v126
    %542 = vmatpush.msra.mxu0 %v125
    %543 = vmatpush.msra.mxu0 %v124
    %544 = vmatmul.f32.gmra.mxu0 %v527
    %v545 = vpop.f32.mrf.mxu0
    %v546 = vadd.f32 %v422, %v545
    %547 = vdwg.mxu0
    %v548 = vsub.f32 1.0, %v502
    %v549 = vmul.f32 %v548, %v413
    %v550 = vtanh.pop %v546
    %v551 = vmul.f32 %v502, %v550
    %v552 = vadd.f32 %v549, %v551
    %s553 = scalar_lea.vmem [#allocation11], 16
    %554 = vst [vmem:[%s553] sm:$0xff] %v552
    %s555 = scalar_lea.vmem [#allocation12], 16
    %556 = vst [vmem:[%s555] sm:$0xff] %v527
    %s557 = scalar_lea.vmem [#allocation5], 96
    %v558 = vld [vmem:[%s557] sm:$0xff]
    %v559 = vld [vmem:[%s557 + $0x8] sm:$0xff]
    %v560 = vld [vmem:[%s557 + $0x10] sm:$0xff]
    %v561 = vld [vmem:[%s557 + $0x18] sm:$0xff]
    %562 = vmatpush.msra.mxu0 %v121
    %563 = vmatpush.msra.mxu0 %v118
    %564 = vmatpush.msra.mxu0 %v115
    %565 = vmatpush.msra.mxu0 %v112
    %566 = vmatpush.msra.mxu0 %v109
    %567 = vmatpush.msra.mxu0 %v106
    %568 = vmatpush.msra.mxu0 %v103
    %569 = vmatpush.msra.mxu0 %v100
    %570 = vmatpush.msra.mxu0 %v97
    %571 = vmatpush.msra.mxu0 %v94
    %572 = vmatpush.msra.mxu0 %v91
    %573 = vmatpush.msra.mxu0 %v88
    %574 = vmatpush.msra.mxu0 %v85
    %575 = vmatpush.msra.mxu0 %v82
    %576 = vmatpush.msra.mxu0 %v79
    %577 = vmatpush.msra.mxu0 %v76
    %578 = vmatmul.f32.gmra.mxu0 %v552
    %v579 = vpop.f32.mrf.mxu0
    %v580 = vadd.f32 %v558, %v579
    %581 = vdwg.mxu0
    %582 = vmatpush.msra.mxu0 %v122
    %583 = vmatpush.msra.mxu0 %v119
    %584 = vmatpush.msra.mxu0 %v116
    %585 = vmatpush.msra.mxu0 %v113
    %586 = vmatpush.msra.mxu0 %v110
    %587 = vmatpush.msra.mxu0 %v107
    %588 = vmatpush.msra.mxu0 %v104
    %589 = vmatpush.msra.mxu0 %v101
    %590 = vmatpush.msra.mxu0 %v98
    %591 = vmatpush.msra.mxu0 %v95
    %592 = vmatpush.msra.mxu0 %v92
    %593 = vmatpush.msra.mxu0 %v89
    %594 = vmatpush.msra.mxu0 %v86
    %595 = vmatpush.msra.mxu0 %v83
    %596 = vmatpush.msra.mxu0 %v80
    %597 = vmatpush.msra.mxu0 %v77
    %598 = vmatmul.f32.gmra.mxu0 %v552
    %v599 = vpop.f32.mrf.mxu0
    %v600 = vadd.f32 %v559, %v599
    %601 = vdwg.mxu0
    %602 = vmatpush.msra.mxu0 %v123
    %603 = vmatpush.msra.mxu0 %v120
    %604 = vmatpush.msra.mxu0 %v117
    %605 = vmatpush.msra.mxu0 %v114
    %606 = vmatpush.msra.mxu0 %v111
    %607 = vmatpush.msra.mxu0 %v108
    %608 = vmatpush.msra.mxu0 %v105
    %609 = vmatpush.msra.mxu0 %v102
    %610 = vmatpush.msra.mxu0 %v99
    %611 = vmatpush.msra.mxu0 %v96
    %612 = vmatpush.msra.mxu0 %v93
    %613 = vmatpush.msra.mxu0 %v90
    %614 = vmatpush.msra.mxu0 %v87
    %615 = vmatpush.msra.mxu0 %v84
    %616 = vmatpush.msra.mxu0 %v81
    %617 = vmatpush.msra.mxu0 %v78
    %618 = vmatmul.f32.gmra.mxu0 %v552
    %v619 = vpop.f32.mrf.mxu0
    %v620 = vadd.f32 %v560, %v619
    %621 = vdwg.mxu0
    %v622 = vxor.u32 %v580, 2147483648
    %v623 = vmul.f32 %v622, 1.442695
    %v624 = vpow.pop %v623
    %v625 = vadd.f32 %v624, 1.0
    %v626 = vrcp.pop %v625
    %v627 = vmul.f32 %v625, %v626
    %v628 = vsub.f32 1.0, %v627
    %v629 = vmul.f32 %v626, %v628
    %v630 = vadd.f32 %v626, %v629
    %vm631 = vweird.f32 %v625
    %vm632 = vweird.f32 %v626
    %vm633 = vmor %vm631, %vm632
    %v634 = vsel %vm633, %v626, %v630
    %v635 = vand.u32 2147483647, %v625
    %vm636 = vcmp.eq.f32.partialorder %v635, 8.507059e+37
    %v637 = vand.u32 %v625, 2147483648
    %v638 = vor.u32 1.1754944e-38, %v637
    %v639 = vsel %vm636, %v638, %v634
    %v640 = vmul.f32 1.0, %v639
    %v641 = vmul.f32 %v225, %v640
    %v642 = vxor.u32 %v600, 2147483648
    %v643 = vmul.f32 %v642, 1.442695
    %v644 = vpow.pop %v643
    %v645 = vadd.f32 %v644, 1.0
    %v646 = vrcp.pop %v645
    %v647 = vmul.f32 %v645, %v646
    %v648 = vsub.f32 1.0, %v647
    %v649 = vmul.f32 %v646, %v648
    %v650 = vadd.f32 %v646, %v649
    %vm651 = vweird.f32 %v645
    %vm652 = vweird.f32 %v646
    %vm653 = vmor %vm651, %vm652
    %v654 = vsel %vm653, %v646, %v650
    %v655 = vand.u32 2147483647, %v645
    %vm656 = vcmp.eq.f32.partialorder %v655, 8.507059e+37
    %v657 = vand.u32 %v645, 2147483648
    %v658 = vor.u32 1.1754944e-38, %v657
    %v659 = vsel %vm656, %v658, %v654
    %v660 = vmul.f32 1.0, %v659
    %v661 = vmul.f32 %v225, %v660
    %v662 = vsub.f32 1.0, %v661
    %v663 = vmul.f32 %v662, %v527
    %v664 = vtanh.pop %v620
    %v665 = vmul.f32 %v661, %v664
    %v666 = vadd.f32 %v663, %v665
    %667 = vmatpush.msra.mxu0 %v139
    %668 = vmatpush.msra.mxu0 %v138
    %669 = vmatpush.msra.mxu0 %v137
    %670 = vmatpush.msra.mxu0 %v136
    %671 = vmatpush.msra.mxu0 %v135
    %672 = vmatpush.msra.mxu0 %v134
    %673 = vmatpush.msra.mxu0 %v133
    %674 = vmatpush.msra.mxu0 %v132
    %675 = vmatpush.msra.mxu0 %v131
    %676 = vmatpush.msra.mxu0 %v130
    %677 = vmatpush.msra.mxu0 %v129
    %678 = vmatpush.msra.mxu0 %v128
    %679 = vmatpush.msra.mxu0 %v127
    %680 = vmatpush.msra.mxu0 %v126
    %681 = vmatpush.msra.mxu0 %v125
    %682 = vmatpush.msra.mxu0 %v124
    %683 = vmatmul.f32.gmra.mxu0 %v666
    %v684 = vpop.f32.mrf.mxu0
    %v685 = vadd.f32 %v561, %v684
    %686 = vdwg.mxu0
    %v687 = vsub.f32 1.0, %v641
    %v688 = vmul.f32 %v687, %v552
    %v689 = vtanh.pop %v685
    %v690 = vmul.f32 %v641, %v689
    %v691 = vadd.f32 %v688, %v690
    %s692 = scalar_lea.vmem [#allocation11], 24
    %693 = vst [vmem:[%s692] sm:$0xff] %v691
    %s694 = scalar_lea.vmem [#allocation12], 24
    %695 = vst [vmem:[%s694] sm:$0xff] %v666
    %s696 = scalar_lea.vmem [#allocation5], 128
    %v697 = vld [vmem:[%s696] sm:$0xff]
    %v698 = vld [vmem:[%s696 + $0x8] sm:$0xff]
    %v699 = vld [vmem:[%s696 + $0x10] sm:$0xff]
    %v700 = vld [vmem:[%s696 + $0x18] sm:$0xff]
    %701 = vmatpush.msra.mxu0 %v121
    %702 = vmatpush.msra.mxu0 %v118
    %703 = vmatpush.msra.mxu0 %v115
    %704 = vmatpush.msra.mxu0 %v112
    %705 = vmatpush.msra.mxu0 %v109
    %706 = vmatpush.msra.mxu0 %v106
    %707 = vmatpush.msra.mxu0 %v103
    %708 = vmatpush.msra.mxu0 %v100
    %709 = vmatpush.msra.mxu0 %v97
    %710 = vmatpush.msra.mxu0 %v94
    %711 = vmatpush.msra.mxu0 %v91
    %712 = vmatpush.msra.mxu0 %v88
    %713 = vmatpush.msra.mxu0 %v85
    %714 = vmatpush.msra.mxu0 %v82
    %715 = vmatpush.msra.mxu0 %v79
    %716 = vmatpush.msra.mxu0 %v76
    %717 = vmatmul.f32.gmra.mxu0 %v691
    %v718 = vpop.f32.mrf.mxu0
    %v719 = vadd.f32 %v697, %v718
    %720 = vdwg.mxu0
    %721 = vmatpush.msra.mxu0 %v122
    %722 = vmatpush.msra.mxu0 %v119
    %723 = vmatpush.msra.mxu0 %v116
    %724 = vmatpush.msra.mxu0 %v113
    %725 = vmatpush.msra.mxu0 %v110
    %726 = vmatpush.msra.mxu0 %v107
    %727 = vmatpush.msra.mxu0 %v104
    %728 = vmatpush.msra.mxu0 %v101
    %729 = vmatpush.msra.mxu0 %v98
    %730 = vmatpush.msra.mxu0 %v95
    %731 = vmatpush.msra.mxu0 %v92
    %732 = vmatpush.msra.mxu0 %v89
    %733 = vmatpush.msra.mxu0 %v86
    %734 = vmatpush.msra.mxu0 %v83
    %735 = vmatpush.msra.mxu0 %v80
    %736 = vmatpush.msra.mxu0 %v77
    %737 = vmatmul.f32.gmra.mxu0 %v691
    %v738 = vpop.f32.mrf.mxu0
    %v739 = vadd.f32 %v698, %v738
    %740 = vdwg.mxu0
    %741 = vmatpush.msra.mxu0 %v123
    %742 = vmatpush.msra.mxu0 %v120
    %743 = vmatpush.msra.mxu0 %v117
    %744 = vmatpush.msra.mxu0 %v114
    %745 = vmatpush.msra.mxu0 %v111
    %746 = vmatpush.msra.mxu0 %v108
    %747 = vmatpush.msra.mxu0 %v105
    %748 = vmatpush.msra.mxu0 %v102
    %749 = vmatpush.msra.mxu0 %v99
    %750 = vmatpush.msra.mxu0 %v96
    %751 = vmatpush.msra.mxu0 %v93
    %752 = vmatpush.msra.mxu0 %v90
    %753 = vmatpush.msra.mxu0 %v87
    %754 = vmatpush.msra.mxu0 %v84
    %755 = vmatpush.msra.mxu0 %v81
    %756 = vmatpush.msra.mxu0 %v78
    %757 = vmatmul.f32.gmra.mxu0 %v691
    %v758 = vpop.f32.mrf.mxu0
    %v759 = vadd.f32 %v699, %v758
    %760 = vdwg.mxu0
    %v761 = vxor.u32 %v719, 2147483648
    %v762 = vmul.f32 %v761, 1.442695
    %v763 = vpow.pop %v762
    %v764 = vadd.f32 %v763, 1.0
    %v765 = vrcp.pop %v764
    %v766 = vmul.f32 %v764, %v765
    %v767 = vsub.f32 1.0, %v766
    %v768 = vmul.f32 %v765, %v767
    %v769 = vadd.f32 %v765, %v768
    %vm770 = vweird.f32 %v764
    %vm771 = vweird.f32 %v765
    %vm772 = vmor %vm770, %vm771
    %v773 = vsel %vm772, %v765, %v769
    %v774 = vand.u32 2147483647, %v764
    %vm775 = vcmp.eq.f32.partialorder %v774, 8.507059e+37
    %v776 = vand.u32 %v764, 2147483648
    %v777 = vor.u32 1.1754944e-38, %v776
    %v778 = vsel %vm775, %v777, %v773
    %v779 = vmul.f32 1.0, %v778
    %v780 = vmul.f32 %v225, %v779
    %v781 = vxor.u32 %v739, 2147483648
    %v782 = vmul.f32 %v781, 1.442695
    %v783 = vpow.pop %v782
    %v784 = vadd.f32 %v783, 1.0
    %v785 = vrcp.pop %v784
    %v786 = vmul.f32 %v784, %v785
    %v787 = vsub.f32 1.0, %v786
    %v788 = vmul.f32 %v785, %v787
    %v789 = vadd.f32 %v785, %v788
    %vm790 = vweird.f32 %v784
    %vm791 = vweird.f32 %v785
    %vm792 = vmor %vm790, %vm791
    %v793 = vsel %vm792, %v785, %v789
    %v794 = vand.u32 2147483647, %v784
    %vm795 = vcmp.eq.f32.partialorder %v794, 8.507059e+37
    %v796 = vand.u32 %v784, 2147483648
    %v797 = vor.u32 1.1754944e-38, %v796
    %v798 = vsel %vm795, %v797, %v793
    %v799 = vmul.f32 1.0, %v798
    %v800 = vmul.f32 %v225, %v799
    %v801 = vsub.f32 1.0, %v800
    %v802 = vmul.f32 %v801, %v666
    %v803 = vtanh.pop %v759
    %v804 = vmul.f32 %v800, %v803
    %v805 = vadd.f32 %v802, %v804
    %806 = vmatpush.msra.mxu0 %v139
    %807 = vmatpush.msra.mxu0 %v138
    %808 = vmatpush.msra.mxu0 %v137
    %809 = vmatpush.msra.mxu0 %v136
    %810 = vmatpush.msra.mxu0 %v135
    %811 = vmatpush.msra.mxu0 %v134
    %812 = vmatpush.msra.mxu0 %v133
    %813 = vmatpush.msra.mxu0 %v132
    %814 = vmatpush.msra.mxu0 %v131
    %815 = vmatpush.msra.mxu0 %v130
    %816 = vmatpush.msra.mxu0 %v129
    %817 = vmatpush.msra.mxu0 %v128
    %818 = vmatpush.msra.mxu0 %v127
    %819 = vmatpush.msra.mxu0 %v126
    %820 = vmatpush.msra.mxu0 %v125
    %821 = vmatpush.msra.mxu0 %v124
    %822 = vmatmul.f32.gmra.mxu0 %v805
    %v823 = vpop.f32.mrf.mxu0
    %v824 = vadd.f32 %v700, %v823
    %825 = vdwg.mxu0
    %v826 = vsub.f32 1.0, %v780
    %v827 = vmul.f32 %v826, %v691
    %v828 = vtanh.pop %v824
    %v829 = vmul.f32 %v780, %v828
    %v830 = vadd.f32 %v827, %v829
    %s831 = scalar_lea.vmem [#allocation11], 32
    %832 = vst [vmem:[%s831] sm:$0xff] %v830
    %s833 = scalar_lea.vmem [#allocation12], 32
    %834 = vst [vmem:[%s833] sm:$0xff] %v805
    %s835 = scalar_lea.vmem [#allocation5], 160
    %v836 = vld [vmem:[%s835] sm:$0xff]
    %v837 = vld [vmem:[%s835 + $0x8] sm:$0xff]
    %v838 = vld [vmem:[%s835 + $0x10] sm:$0xff]
    %v839 = vld [vmem:[%s835 + $0x18] sm:$0xff]
    %840 = vmatpush.msra.mxu0 %v121
    %841 = vmatpush.msra.mxu0 %v118
    %842 = vmatpush.msra.mxu0 %v115
    %843 = vmatpush.msra.mxu0 %v112
    %844 = vmatpush.msra.mxu0 %v109
    %845 = vmatpush.msra.mxu0 %v106
    %846 = vmatpush.msra.mxu0 %v103
    %847 = vmatpush.msra.mxu0 %v100
    %848 = vmatpush.msra.mxu0 %v97
    %849 = vmatpush.msra.mxu0 %v94
    %850 = vmatpush.msra.mxu0 %v91
    %851 = vmatpush.msra.mxu0 %v88
    %852 = vmatpush.msra.mxu0 %v85
    %853 = vmatpush.msra.mxu0 %v82
    %854 = vmatpush.msra.mxu0 %v79
    %855 = vmatpush.msra.mxu0 %v76
    %856 = vmatmul.f32.gmra.mxu0 %v830
    %v857 = vpop.f32.mrf.mxu0
    %v858 = vadd.f32 %v836, %v857
    %859 = vdwg.mxu0
    %860 = vmatpush.msra.mxu0 %v122
    %861 = vmatpush.msra.mxu0 %v119
    %862 = vmatpush.msra.mxu0 %v116
    %863 = vmatpush.msra.mxu0 %v113
    %864 = vmatpush.msra.mxu0 %v110
    %865 = vmatpush.msra.mxu0 %v107
    %866 = vmatpush.msra.mxu0 %v104
    %867 = vmatpush.msra.mxu0 %v101
    %868 = vmatpush.msra.mxu0 %v98
    %869 = vmatpush.msra.mxu0 %v95
    %870 = vmatpush.msra.mxu0 %v92
    %871 = vmatpush.msra.mxu0 %v89
    %872 = vmatpush.msra.mxu0 %v86
    %873 = vmatpush.msra.mxu0 %v83
    %874 = vmatpush.msra.mxu0 %v80
    %875 = vmatpush.msra.mxu0 %v77
    %876 = vmatmul.f32.gmra.mxu0 %v830
    %v877 = vpop.f32.mrf.mxu0
    %v878 = vadd.f32 %v837, %v877
    %879 = vdwg.mxu0
    %880 = vmatpush.msra.mxu0 %v123
    %881 = vmatpush.msra.mxu0 %v120
    %882 = vmatpush.msra.mxu0 %v117
    %883 = vmatpush.msra.mxu0 %v114
    %884 = vmatpush.msra.mxu0 %v111
    %885 = vmatpush.msra.mxu0 %v108
    %886 = vmatpush.msra.mxu0 %v105
    %887 = vmatpush.msra.mxu0 %v102
    %888 = vmatpush.msra.mxu0 %v99
    %889 = vmatpush.msra.mxu0 %v96
    %890 = vmatpush.msra.mxu0 %v93
    %891 = vmatpush.msra.mxu0 %v90
    %892 = vmatpush.msra.mxu0 %v87
    %893 = vmatpush.msra.mxu0 %v84
    %894 = vmatpush.msra.mxu0 %v81
    %895 = vmatpush.msra.mxu0 %v78
    %896 = vmatmul.f32.gmra.mxu0 %v830
    %v897 = vpop.f32.mrf.mxu0
    %v898 = vadd.f32 %v838, %v897
    %899 = vdwg.mxu0
    %v900 = vxor.u32 %v858, 2147483648
    %v901 = vmul.f32 %v900, 1.442695
    %v902 = vpow.pop %v901
    %v903 = vadd.f32 %v902, 1.0
    %v904 = vrcp.pop %v903
    %v905 = vmul.f32 %v903, %v904
    %v906 = vsub.f32 1.0, %v905
    %v907 = vmul.f32 %v904, %v906
    %v908 = vadd.f32 %v904, %v907
    %vm909 = vweird.f32 %v903
    %vm910 = vweird.f32 %v904
    %vm911 = vmor %vm909, %vm910
    %v912 = vsel %vm911, %v904, %v908
    %v913 = vand.u32 2147483647, %v903
    %vm914 = vcmp.eq.f32.partialorder %v913, 8.507059e+37
    %v915 = vand.u32 %v903, 2147483648
    %v916 = vor.u32 1.1754944e-38, %v915
    %v917 = vsel %vm914, %v916, %v912
    %v918 = vmul.f32 1.0, %v917
    %v919 = vmul.f32 %v225, %v918
    %v920 = vxor.u32 %v878, 2147483648
    %v921 = vmul.f32 %v920, 1.442695
    %v922 = vpow.pop %v921
    %v923 = vadd.f32 %v922, 1.0
    %v924 = vrcp.pop %v923
    %v925 = vmul.f32 %v923, %v924
    %v926 = vsub.f32 1.0, %v925
    %v927 = vmul.f32 %v924, %v926
    %v928 = vadd.f32 %v924, %v927
    %vm929 = vweird.f32 %v923
    %vm930 = vweird.f32 %v924
    %vm931 = vmor %vm929, %vm930
    %v932 = vsel %vm931, %v924, %v928
    %v933 = vand.u32 2147483647, %v923
    %vm934 = vcmp.eq.f32.partialorder %v933, 8.507059e+37
    %v935 = vand.u32 %v923, 2147483648
    %v936 = vor.u32 1.1754944e-38, %v935
    %v937 = vsel %vm934, %v936, %v932
    %v938 = vmul.f32 1.0, %v937
    %v939 = vmul.f32 %v225, %v938
    %v940 = vsub.f32 1.0, %v939
    %v941 = vmul.f32 %v940, %v805
    %v942 = vtanh.pop %v898
    %v943 = vmul.f32 %v939, %v942
    %v944 = vadd.f32 %v941, %v943
    %945 = vmatpush.msra.mxu0 %v139
    %946 = vmatpush.msra.mxu0 %v138
    %947 = vmatpush.msra.mxu0 %v137
    %948 = vmatpush.msra.mxu0 %v136
    %949 = vmatpush.msra.mxu0 %v135
    %950 = vmatpush.msra.mxu0 %v134
    %951 = vmatpush.msra.mxu0 %v133
    %952 = vmatpush.msra.mxu0 %v132
    %953 = vmatpush.msra.mxu0 %v131
    %954 = vmatpush.msra.mxu0 %v130
    %955 = vmatpush.msra.mxu0 %v129
    %956 = vmatpush.msra.mxu0 %v128
    %957 = vmatpush.msra.mxu0 %v127
    %958 = vmatpush.msra.mxu0 %v126
    %959 = vmatpush.msra.mxu0 %v125
    %960 = vmatpush.msra.mxu0 %v124
    %961 = vmatmul.f32.gmra.mxu0 %v944
    %v962 = vpop.f32.mrf.mxu0
    %v963 = vadd.f32 %v839, %v962
    %964 = vdwg.mxu0
    %v965 = vsub.f32 1.0, %v919
    %v966 = vmul.f32 %v965, %v830
    %v967 = vtanh.pop %v963
    %v968 = vmul.f32 %v919, %v967
    %v969 = vadd.f32 %v966, %v968
    %s970 = scalar_lea.vmem [#allocation11], 40
    %971 = vst [vmem:[%s970] sm:$0xff] %v969
    %s972 = scalar_lea.vmem [#allocation12], 40
    %973 = vst [vmem:[%s972] sm:$0xff] %v944
    %s974 = scalar_lea.vmem [#allocation5], 192
    %v975 = vld [vmem:[%s974] sm:$0xff]
    %v976 = vld [vmem:[%s974 + $0x8] sm:$0xff]
    %v977 = vld [vmem:[%s974 + $0x10] sm:$0xff]
    %v978 = vld [vmem:[%s974 + $0x18] sm:$0xff]
    %979 = vmatpush.msra.mxu0 %v121
    %980 = vmatpush.msra.mxu0 %v118
    %981 = vmatpush.msra.mxu0 %v115
    %982 = vmatpush.msra.mxu0 %v112
    %983 = vmatpush.msra.mxu0 %v109
    %984 = vmatpush.msra.mxu0 %v106
    %985 = vmatpush.msra.mxu0 %v103
    %986 = vmatpush.msra.mxu0 %v100
    %987 = vmatpush.msra.mxu0 %v97
    %988 = vmatpush.msra.mxu0 %v94
    %989 = vmatpush.msra.mxu0 %v91
    %990 = vmatpush.msra.mxu0 %v88
    %991 = vmatpush.msra.mxu0 %v85
    %992 = vmatpush.msra.mxu0 %v82
    %993 = vmatpush.msra.mxu0 %v79
    %994 = vmatpush.msra.mxu0 %v76
    %995 = vmatmul.f32.gmra.mxu0 %v969
    %v996 = vpop.f32.mrf.mxu0
    %v997 = vadd.f32 %v975, %v996
    %998 = vdwg.mxu0
    %999 = vmatpush.msra.mxu0 %v122
    %1000 = vmatpush.msra.mxu0 %v119
    %1001 = vmatpush.msra.mxu0 %v116
    %1002 = vmatpush.msra.mxu0 %v113
    %1003 = vmatpush.msra.mxu0 %v110
    %1004 = vmatpush.msra.mxu0 %v107
    %1005 = vmatpush.msra.mxu0 %v104
    %1006 = vmatpush.msra.mxu0 %v101
    %1007 = vmatpush.msra.mxu0 %v98
    %1008 = vmatpush.msra.mxu0 %v95
    %1009 = vmatpush.msra.mxu0 %v92
    %1010 = vmatpush.msra.mxu0 %v89
    %1011 = vmatpush.msra.mxu0 %v86
    %1012 = vmatpush.msra.mxu0 %v83
    %1013 = vmatpush.msra.mxu0 %v80
    %1014 = vmatpush.msra.mxu0 %v77
    %1015 = vmatmul.f32.gmra.mxu0 %v969
    %v1016 = vpop.f32.mrf.mxu0
    %v1017 = vadd.f32 %v976, %v1016
    %1018 = vdwg.mxu0
    %1019 = vmatpush.msra.mxu0 %v123
    %1020 = vmatpush.msra.mxu0 %v120
    %1021 = vmatpush.msra.mxu0 %v117
    %1022 = vmatpush.msra.mxu0 %v114
    %1023 = vmatpush.msra.mxu0 %v111
    %1024 = vmatpush.msra.mxu0 %v108
    %1025 = vmatpush.msra.mxu0 %v105
    %1026 = vmatpush.msra.mxu0 %v102
    %1027 = vmatpush.msra.mxu0 %v99
    %1028 = vmatpush.msra.mxu0 %v96
    %1029 = vmatpush.msra.mxu0 %v93
    %1030 = vmatpush.msra.mxu0 %v90
    %1031 = vmatpush.msra.mxu0 %v87
    %1032 = vmatpush.msra.mxu0 %v84
    %1033 = vmatpush.msra.mxu0 %v81
    %1034 = vmatpush.msra.mxu0 %v78
    %1035 = vmatmul.f32.gmra.mxu0 %v969
    %v1036 = vpop.f32.mrf.mxu0
    %v1037 = vadd.f32 %v977, %v1036
    %1038 = vdwg.mxu0
    %v1039 = vxor.u32 %v997, 2147483648
    %v1040 = vmul.f32 %v1039, 1.442695
    %v1041 = vpow.pop %v1040
    %v1042 = vadd.f32 %v1041, 1.0
    %v1043 = vrcp.pop %v1042
    %v1044 = vmul.f32 %v1042, %v1043
    %v1045 = vsub.f32 1.0, %v1044
    %v1046 = vmul.f32 %v1043, %v1045
    %v1047 = vadd.f32 %v1043, %v1046
    %vm1048 = vweird.f32 %v1042
    %vm1049 = vweird.f32 %v1043
    %vm1050 = vmor %vm1048, %vm1049
    %v1051 = vsel %vm1050, %v1043, %v1047
    %v1052 = vand.u32 2147483647, %v1042
    %vm1053 = vcmp.eq.f32.partialorder %v1052, 8.507059e+37
    %v1054 = vand.u32 %v1042, 2147483648
    %v1055 = vor.u32 1.1754944e-38, %v1054
    %v1056 = vsel %vm1053, %v1055, %v1051
    %v1057 = vmul.f32 1.0, %v1056
    %v1058 = vmul.f32 %v225, %v1057
    %v1059 = vxor.u32 %v1017, 2147483648
    %v1060 = vmul.f32 %v1059, 1.442695
    %v1061 = vpow.pop %v1060
    %v1062 = vadd.f32 %v1061, 1.0
    %v1063 = vrcp.pop %v1062
    %v1064 = vmul.f32 %v1062, %v1063
    %v1065 = vsub.f32 1.0, %v1064
    %v1066 = vmul.f32 %v1063, %v1065
    %v1067 = vadd.f32 %v1063, %v1066
    %vm1068 = vweird.f32 %v1062
    %vm1069 = vweird.f32 %v1063
    %vm1070 = vmor %vm1068, %vm1069
    %v1071 = vsel %vm1070, %v1063, %v1067
    %v1072 = vand.u32 2147483647, %v1062
    %vm1073 = vcmp.eq.f32.partialorder %v1072, 8.507059e+37
    %v1074 = vand.u32 %v1062, 2147483648
    %v1075 = vor.u32 1.1754944e-38, %v1074
    %v1076 = vsel %vm1073, %v1075, %v1071
    %v1077 = vmul.f32 1.0, %v1076
    %v1078 = vmul.f32 %v225, %v1077
    %v1079 = vsub.f32 1.0, %v1078
    %v1080 = vmul.f32 %v1079, %v944
    %v1081 = vtanh.pop %v1037
    %v1082 = vmul.f32 %v1078, %v1081
    %v1083 = vadd.f32 %v1080, %v1082
    %1084 = vmatpush.msra.mxu0 %v139
    %1085 = vmatpush.msra.mxu0 %v138
    %1086 = vmatpush.msra.mxu0 %v137
    %1087 = vmatpush.msra.mxu0 %v136
    %1088 = vmatpush.msra.mxu0 %v135
    %1089 = vmatpush.msra.mxu0 %v134
    %1090 = vmatpush.msra.mxu0 %v133
    %1091 = vmatpush.msra.mxu0 %v132
    %1092 = vmatpush.msra.mxu0 %v131
    %1093 = vmatpush.msra.mxu0 %v130
    %1094 = vmatpush.msra.mxu0 %v129
    %1095 = vmatpush.msra.mxu0 %v128
    %1096 = vmatpush.msra.mxu0 %v127
    %1097 = vmatpush.msra.mxu0 %v126
    %1098 = vmatpush.msra.mxu0 %v125
    %1099 = vmatpush.msra.mxu0 %v124
    %1100 = vmatmul.f32.gmra.mxu0 %v1083
    %v1101 = vpop.f32.mrf.mxu0
    %v1102 = vadd.f32 %v978, %v1101
    %1103 = vdwg.mxu0
    %v1104 = vsub.f32 1.0, %v1058
    %v1105 = vmul.f32 %v1104, %v969
    %v1106 = vtanh.pop %v1102
    %v1107 = vmul.f32 %v1058, %v1106
    %v1108 = vadd.f32 %v1105, %v1107
    %s1109 = scalar_lea.vmem [#allocation11], 48
    %1110 = vst [vmem:[%s1109] sm:$0xff] %v1108
    %s1111 = scalar_lea.vmem [#allocation12], 48
    %1112 = vst [vmem:[%s1111] sm:$0xff] %v1083
    %s1113 = scalar_lea.vmem [#allocation5], 224
    %v1114 = vld [vmem:[%s1113] sm:$0xff]
    %v1115 = vld [vmem:[%s1113 + $0x8] sm:$0xff]
    %v1116 = vld [vmem:[%s1113 + $0x10] sm:$0xff]
    %v1117 = vld [vmem:[%s1113 + $0x18] sm:$0xff]
    %1118 = vmatpush.msra.mxu0 %v121
    %1119 = vmatpush.msra.mxu0 %v118
    %1120 = vmatpush.msra.mxu0 %v115
    %1121 = vmatpush.msra.mxu0 %v112
    %1122 = vmatpush.msra.mxu0 %v109
    %1123 = vmatpush.msra.mxu0 %v106
    %1124 = vmatpush.msra.mxu0 %v103
    %1125 = vmatpush.msra.mxu0 %v100
    %1126 = vmatpush.msra.mxu0 %v97
    %1127 = vmatpush.msra.mxu0 %v94
    %1128 = vmatpush.msra.mxu0 %v91
    %1129 = vmatpush.msra.mxu0 %v88
    %1130 = vmatpush.msra.mxu0 %v85
    %1131 = vmatpush.msra.mxu0 %v82
    %1132 = vmatpush.msra.mxu0 %v79
    %1133 = vmatpush.msra.mxu0 %v76
    %1134 = vmatmul.f32.gmra.mxu0 %v1108
    %v1135 = vpop.f32.mrf.mxu0
    %v1136 = vadd.f32 %v1114, %v1135
    %1137 = vdwg.mxu0
    %1138 = vmatpush.msra.mxu0 %v122
    %1139 = vmatpush.msra.mxu0 %v119
    %1140 = vmatpush.msra.mxu0 %v116
    %1141 = vmatpush.msra.mxu0 %v113
    %1142 = vmatpush.msra.mxu0 %v110
    %1143 = vmatpush.msra.mxu0 %v107
    %1144 = vmatpush.msra.mxu0 %v104
    %1145 = vmatpush.msra.mxu0 %v101
    %1146 = vmatpush.msra.mxu0 %v98
    %1147 = vmatpush.msra.mxu0 %v95
    %1148 = vmatpush.msra.mxu0 %v92
    %1149 = vmatpush.msra.mxu0 %v89
    %1150 = vmatpush.msra.mxu0 %v86
    %1151 = vmatpush.msra.mxu0 %v83
    %1152 = vmatpush.msra.mxu0 %v80
    %1153 = vmatpush.msra.mxu0 %v77
    %1154 = vmatmul.f32.gmra.mxu0 %v1108
    %v1155 = vpop.f32.mrf.mxu0
    %v1156 = vadd.f32 %v1115, %v1155
    %1157 = vdwg.mxu0
    %1158 = vmatpush.msra.mxu0 %v123
    %1159 = vmatpush.msra.mxu0 %v120
    %1160 = vmatpush.msra.mxu0 %v117
    %1161 = vmatpush.msra.mxu0 %v114
    %1162 = vmatpush.msra.mxu0 %v111
    %1163 = vmatpush.msra.mxu0 %v108
    %1164 = vmatpush.msra.mxu0 %v105
    %1165 = vmatpush.msra.mxu0 %v102
    %1166 = vmatpush.msra.mxu0 %v99
    %1167 = vmatpush.msra.mxu0 %v96
    %1168 = vmatpush.msra.mxu0 %v93
    %1169 = vmatpush.msra.mxu0 %v90
    %1170 = vmatpush.msra.mxu0 %v87
    %1171 = vmatpush.msra.mxu0 %v84
    %1172 = vmatpush.msra.mxu0 %v81
    %1173 = vmatpush.msra.mxu0 %v78
    %1174 = vmatmul.f32.gmra.mxu0 %v1108
    %v1175 = vpop.f32.mrf.mxu0
    %v1176 = vadd.f32 %v1116, %v1175
    %1177 = vdwg.mxu0
    %v1178 = vxor.u32 %v1136, 2147483648
    %v1179 = vmul.f32 %v1178, 1.442695
    %v1180 = vpow.pop %v1179
    %v1181 = vadd.f32 %v1180, 1.0
    %v1182 = vrcp.pop %v1181
    %v1183 = vmul.f32 %v1181, %v1182
    %v1184 = vsub.f32 1.0, %v1183
    %v1185 = vmul.f32 %v1182, %v1184
    %v1186 = vadd.f32 %v1182, %v1185
    %vm1187 = vweird.f32 %v1181
    %vm1188 = vweird.f32 %v1182
    %vm1189 = vmor %vm1187, %vm1188
    %v1190 = vsel %vm1189, %v1182, %v1186
    %v1191 = vand.u32 2147483647, %v1181
    %vm1192 = vcmp.eq.f32.partialorder %v1191, 8.507059e+37
    %v1193 = vand.u32 %v1181, 2147483648
    %v1194 = vor.u32 1.1754944e-38, %v1193
    %v1195 = vsel %vm1192, %v1194, %v1190
    %v1196 = vmul.f32 1.0, %v1195
    %v1197 = vmul.f32 %v225, %v1196
    %v1198 = vxor.u32 %v1156, 2147483648
    %v1199 = vmul.f32 %v1198, 1.442695
    %v1200 = vpow.pop %v1199
    %v1201 = vadd.f32 %v1200, 1.0
    %v1202 = vrcp.pop %v1201
    %v1203 = vmul.f32 %v1201, %v1202
    %v1204 = vsub.f32 1.0, %v1203
    %v1205 = vmul.f32 %v1202, %v1204
    %v1206 = vadd.f32 %v1202, %v1205
    %vm1207 = vweird.f32 %v1201
    %vm1208 = vweird.f32 %v1202
    %vm1209 = vmor %vm1207, %vm1208
    %v1210 = vsel %vm1209, %v1202, %v1206
    %v1211 = vand.u32 2147483647, %v1201
    %vm1212 = vcmp.eq.f32.partialorder %v1211, 8.507059e+37
    %v1213 = vand.u32 %v1201, 2147483648
    %v1214 = vor.u32 1.1754944e-38, %v1213
    %v1215 = vsel %vm1212, %v1214, %v1210
    %v1216 = vmul.f32 1.0, %v1215
    %v1217 = vmul.f32 %v225, %v1216
    %v1218 = vsub.f32 1.0, %v1217
    %v1219 = vmul.f32 %v1218, %v1083
    %v1220 = vtanh.pop %v1176
    %v1221 = vmul.f32 %v1217, %v1220
    %v1222 = vadd.f32 %v1219, %v1221
    %1223 = vmatpush.msra.mxu0 %v139
    %1224 = vmatpush.msra.mxu0 %v138
    %1225 = vmatpush.msra.mxu0 %v137
    %1226 = vmatpush.msra.mxu0 %v136
    %1227 = vmatpush.msra.mxu0 %v135
    %1228 = vmatpush.msra.mxu0 %v134
    %1229 = vmatpush.msra.mxu0 %v133
    %1230 = vmatpush.msra.mxu0 %v132
    %1231 = vmatpush.msra.mxu0 %v131
    %1232 = vmatpush.msra.mxu0 %v130
    %1233 = vmatpush.msra.mxu0 %v129
    %1234 = vmatpush.msra.mxu0 %v128
    %1235 = vmatpush.msra.mxu0 %v127
    %1236 = vmatpush.msra.mxu0 %v126
    %1237 = vmatpush.msra.mxu0 %v125
    %1238 = vmatpush.msra.mxu0 %v124
    %1239 = vmatmul.f32.gmra.mxu0 %v1222
    %v1240 = vpop.f32.mrf.mxu0
    %v1241 = vadd.f32 %v1117, %v1240
    %1242 = vdwg.mxu0
    %v1243 = vsub.f32 1.0, %v1197
    %v1244 = vmul.f32 %v1243, %v1108
    %v1245 = vtanh.pop %v1241
    %v1246 = vmul.f32 %v1197, %v1245
    %v1247 = vadd.f32 %v1244, %v1246
    %s1248 = scalar_lea.vmem [#allocation11], 56
    %1249 = vst [vmem:[%s1248] sm:$0xff] %v1247
    %s1250 = scalar_lea.vmem [#allocation12], 56
    %1251 = vst [vmem:[%s1250] sm:$0xff] %v1222
    %1252 = vst [vmem:[#allocation2] sm:$0xff] %v1247
    %1253 = vst [vmem:[#allocation3] sm:$0xff] %v1222
    // Predicated region
    $region34: #{tpu_custom_call.1} parent=1 // pred_check
      _
    $region35: #{tpu_custom_call.1} parent=1 // pred_check_branch
      %1255 = sbr.rel (0) target = $region37
    $region36: #{tpu_custom_call.1} parent=1 // pred_region
      %1257 = vsyncadd [#allocation7], 0
      %s1258 = sshll.u32 [#allocation11], 4
      %s1259 = int_to_ptr.vmem [resolvable:$true] %s1258
      %s1260 = sshll.u32 %s4, 4
      %s1261 = int_to_ptr.hbm [resolvable:$true] %s1260
      %1266 = dma.vmem_to_hbm [thread:$0]  %s1259, 1024, %s1261, [#allocation7], 128, 128, 8
    $region37: #{tpu_custom_call.1} parent=1 // pred_fallthru
      _
    // Predicated region
    $region38: #{tpu_custom_call.1} parent=1 // pred_check
      _
    $region39: #{tpu_custom_call.1} parent=1 // pred_check_branch
      %1268 = sbr.rel (0) target = $region41
    $region40: #{tpu_custom_call.1} parent=1 // pred_region
      %1270 = vsyncadd [#allocation13], 0
      %s1271 = sshll.u32 [#allocation12], 4
      %s1272 = int_to_ptr.vmem [resolvable:$true] %s1271
      %s1273 = sshll.u32 %s5, 4
      %s1274 = int_to_ptr.hbm [resolvable:$true] %s1273
      %1279 = dma.vmem_to_hbm [thread:$0]  %s1272, 1024, %s1274, [#allocation13], 128, 128, 8
    $region41: #{tpu_custom_call.1} parent=1 // pred_fallthru
      _
    // Predicated region
    $region42: #{tpu_custom_call.1} parent=1 // pred_check
      _
    $region43: #{tpu_custom_call.1} parent=1 // pred_check_branch
      %1281 = sbr.rel (0) target = $region45
    $region44: #{tpu_custom_call.1} parent=1 // pred_region
      %1283 = dma.done [#allocation7], 1024
    $region45: #{tpu_custom_call.1} parent=1 // pred_fallthru
      _
    // Predicated region
    $region46: #{tpu_custom_call.1} parent=1 // pred_check
      _
    $region47: #{tpu_custom_call.1} parent=1 // pred_check_branch
      %1285 = sbr.rel (0) target = $region49
    $region48: #{tpu_custom_call.1} parent=1 // pred_region
      %1287 = dma.done [#allocation13], 1024
    $region49: #{tpu_custom_call.1} parent=1 // pred_fallthru
      _
    %1288 = vsyncpa [#allocation6], 1
    %1289 = vsyncpa [#allocation9], 1
    %1290 = vsyncpa [#allocation7], 1
    %1291 = vsyncpa [#allocation13], 1

</llo_original>
